<compile_context>
chip_gen: v6e
topology: v6e:2x2x1
jax: 0.10.0
libtpu: 0.0.40
codegen_flags: <defaults>
</compile_context>

<pallas_src>
import functools

import jax
import jax.numpy as jnp
from jax.experimental import pallas as pl
from jax.experimental.pallas import tpu as pltpu

_LANE = 128
_SUBLANE = 8

# Flipped to False (and cached) if this jax build rejects pipeline_mode=Buffered(1).
_SINGLE_BUFFER_OK = True


def _vmem_limit_bytes():
    """~85% of this generation's physical VMEM (v5e/v6e 128 MiB, v7x 64 MiB)."""
    try:
        cap = getattr(pltpu.get_tpu_info(), "vmem_capacity_bytes", None)
        if cap:
            return int(cap * 0.85)
    except Exception:
        pass
    return 32 * 1024 * 1024  # conservative fallback


# ----------------------------- Pallas kernels --------------------------------

def _conv_stats_kernel(xw_ref, w_ref, y_ref, sum_ref, ssq_ref, *,
                       tile_rows, wk, kh, inner):
    """Pass 1: conv as kh shifted matmuls + per-(sample,channel) partial stats.

    xw_ref : (Hp*Wk, KW*Cin)    bf16  width-unrolled padded input (resident/sample)
    w_ref  : (KH, KW*Cin, Cpad) bf16  conv weight (resident)
    y_ref  : (TH*Wk, Cpad)      bf16  conv output tile (lane-dense Cpad = 128*m)
    sum_ref: (8, Cpad)          f32   sublane partial sums   (resident per chunk)
    ssq_ref: (8, Cpad)          f32   sublane partial sums of squares
    """
    c = pl.program_id(1)          # parallel row-chunk (megacore axis for small N)
    r = pl.program_id(2)          # arbitrary (reduction) axis within the chunk

    @pl.when(r == 0)
    def _():
        sum_ref[...] = jnp.zeros_like(sum_ref)
        ssq_ref[...] = jnp.zeros_like(ssq_ref)

    rows = tile_rows * wk
    row0 = (c * inner + r) * tile_rows
    acc = jnp.zeros((rows, y_ref.shape[-1]), jnp.float32)
    for dy in range(kh):          # static unroll: kh shifted matmuls, f32 accumulate
        start = pl.multiple_of((row0 + dy) * wk, _SUBLANE)   # wk % 8 == 0 -> aligned
        xs = xw_ref[pl.ds(start, rows), :]                   # free view, no relayout
        acc = acc + jnp.dot(xs, w_ref[dy], preferred_element_type=jnp.float32)

    # bf16 store of the intermediate; statistics use the exact f32 accumulator.
    y_ref[...] = acc.astype(y_ref.dtype)

    # 8-sublane partials: pure-VPU reduction over the major axis (no per-tile
    # cross-sublane XLU reduce); the final 8-row + cross-chunk fold is in JAX.
    acc3 = acc.reshape(rows // _SUBLANE, _SUBLANE, acc.shape[-1])
    sum_ref[...] += jnp.sum(acc3, axis=0)
    ssq_ref[...] += jnp.sum(acc3 * acc3, axis=0)


def _norm_act_kernel(y_ref, scale_ref, shift_ref, o_ref, *, slope, cout):
    """Pass 2: y*scale + shift then LeakyReLU; writes only the cout valid lanes."""
    y = y_ref[...].astype(jnp.float32)
    yn = y[:, :cout] * scale_ref[...] + shift_ref[...]
    o_ref[...] = jnp.where(yn >= 0, yn, slope * yn).astype(o_ref.dtype)


# ------------------------------- Wrapper --------------------------------------

def _pick_row_tile(h, wk, target_rows=2048):
    """Largest divisor TH of H with TH*Wk <= target_rows (falls back to 1)."""
    best = 1
    for th in range(1, h + 1):
        if h % th == 0 and th * wk <= target_rows:
            best = th
    return best


def conv_dropout_norm_relu(x, weight, gamma, beta, *, stride=1, eps=1e-5,
                           slope=0.01, tile_rows=None, data_format="NCHW"):
    """x: (N, Cin, H, W) NCHW; weight: (Cout, Cin, kh, kw). Returns f32.

    Semantics: Conv2d(bias=False, stride=1, 'same' padding)
               -> InstanceNorm2d(affine=True, eps) -> LeakyReLU(slope).
    dropout_op=None in this config -> identity (nothing to apply).
    data_format='NHWC' skips the final (small) transpose for NHWC pipelines.
    """
    global _SINGLE_BUFFER_OK
    assert stride == 1, "only stride=1 supported by this kernel"
    n, cin, h, w = x.shape
    cout, cin_w, kh, kw = weight.shape
    assert cin == cin_w
    assert kh % 2 == 1 and kw % 2 == 1, "odd kernel sizes only"
    ph, pw = (kh - 1) // 2, (kw - 1) // 2
    hp = h + 2 * ph
    # Pad the flattened row stride to a multiple of 8 so every kh-shift slice
    # start inside the kernel is sublane aligned.  The padded columns are all
    # zero -> they contribute nothing to the statistics and are cropped later.
    wk = ((w + _SUBLANE - 1) // _SUBLANE) * _SUBLANE
    cpad = ((cout + _LANE - 1) // _LANE) * _LANE     # lane-dense conv channels

    if tile_rows is None:
        tile_rows = _pick_row_tile(h, wk)
    assert h % tile_rows == 0, (h, tile_rows)
    n_tiles = h // tile_rows
    rows = tile_rows * wk
    # Split row tiles into (parallel chunk, arbitrary inner).
    n_chunks = 2 if (n_tiles >= 2 and n_tiles % 2 == 0) else 1
    inner = n_tiles // n_chunks
    vmem_limit = _vmem_limit_bytes()

    # ---- glue (plain JAX, bf16): NCHW -> NHWC, pad, width-only unroll ----
    # Only a KW-wide unroll is materialized; height shifts happen in-kernel, so
    # HBM read traffic is ~KW*input instead of KH*KW*input.
    x_nhwc = jnp.transpose(x, (0, 2, 3, 1)).astype(jnp.bfloat16)       # (N,H,W,Cin)
    xpad = jnp.pad(x_nhwc, ((0, 0), (ph, ph), (pw, pw), (0, 0)))       # (N,Hp,Wp,Cin)
    xw = jnp.stack([xpad[:, :, dx:dx + w, :] for dx in range(kw)], axis=3)
    if wk != w:                                                        # (N,Hp,W,KW,Cin)
        xw = jnp.pad(xw, ((0, 0), (0, 0), (0, wk - w), (0, 0), (0, 0)))
    xw = xw.reshape(n, hp * wk, kw * cin)                              # (N,Hp*Wk,KW*Cin)

    # Conv weight -> (KH, KW*Cin, Cpad), bf16, zero-padded output channels.
    w3 = jnp.transpose(weight, (2, 3, 1, 0)).reshape(kh, kw * cin, cout)
    w3 = jnp.pad(w3, ((0, 0), (0, 0), (0, cpad - cout))).astype(jnp.bfloat16)

    # ---- pass 1: conv tiles (bf16) + per-channel partial statistics (f32) ----
    conv_kernel = functools.partial(_conv_stats_kernel, tile_rows=tile_rows,
                                    wk=wk, kh=kh, inner=inner)

    def _run_pass1(single_buffer):
        # Whole-sample input / weights never change their block inside a sample;
        # single-buffering them halves their VMEM footprint (key on v7x 64 MiB).
        pm = ({"pipeline_mode": pl.Buffered(buffer_count=1)}
              if single_buffer else {})
        return pl.pallas_call(
            conv_kernel,
            grid=(n, n_chunks, inner),
            in_specs=[
                pl.BlockSpec((None, hp * wk, kw * cin),
                             lambda i, c, r: (i, 0, 0), **pm),
                pl.BlockSpec((kh, kw * cin, cpad),
                             lambda i, c, r: (0, 0, 0), **pm),
            ],
            out_specs=[
                pl.BlockSpec((None, rows, cpad),
                             lambda i, c, r: (i, c * inner + r, 0)),
                pl.BlockSpec((None, None, _SUBLANE, cpad),
                             lambda i, c, r: (i, c, 0, 0)),      # accum over r
                pl.BlockSpec((None, None, _SUBLANE, cpad),
                             lambda i, c, r: (i, c, 0, 0)),      # accum over r
            ],
            out_shape=(
                jax.ShapeDtypeStruct((n, h * wk, cpad), jnp.bfloat16),
                jax.ShapeDtypeStruct((n, n_chunks, _SUBLANE, cpad), jnp.float32),
                jax.ShapeDtypeStruct((n, n_chunks, _SUBLANE, cpad), jnp.float32),
            ),
            compiler_params=pltpu.CompilerParams(
                dimension_semantics=("parallel", "parallel", "arbitrary"),
                vmem_limit_bytes=vmem_limit),
        )(xw, w3)

    if _SINGLE_BUFFER_OK:
        try:
            y, s1, s2 = _run_pass1(True)
        except Exception:       # this jax build rejects Buffered(1) here
            _SINGLE_BUFFER_OK = False
            y, s1, s2 = _run_pass1(False)
    else:
        y, s1, s2 = _run_pass1(False)

    # ---- tiny per-(sample, channel) fold (plain JAX): affine -> scale/shift ----
    count = float(h * w)                       # zero padded columns are excluded
    s_tot = jnp.sum(s1, axis=(1, 2))[:, :cout]                    # (N, Cout)
    ss_tot = jnp.sum(s2, axis=(1, 2))[:, :cout]
    mean = s_tot / count
    var = jnp.maximum(ss_tot / count - mean * mean, 0.0)          # biased var
    inv = jax.lax.rsqrt(var + eps)
    g = gamma.astype(jnp.float32)[None, :]
    b = beta.astype(jnp.float32)[None, :]
    scale = (g * inv)[:, None, :]                                  # (N, 1, Cout)
    shift = (b - mean * g * inv)[:, None, :]                       # (N, 1, Cout)

    # ---- pass 2: normalize + LeakyReLU (only cout valid lanes are written) ----
    norm_kernel = functools.partial(_norm_act_kernel, slope=slope, cout=cout)
    out_flat = pl.pallas_call(
        norm_kernel,
        grid=(n, n_tiles),
        in_specs=[
            pl.BlockSpec((None, rows, cpad), lambda i, r: (i, r, 0)),
            pl.BlockSpec((None, 1, cout), lambda i, r: (i, 0, 0)),
            pl.BlockSpec((None, 1, cout), lambda i, r: (i, 0, 0)),
        ],
        out_specs=pl.BlockSpec((None, rows, cout), lambda i, r: (i, r, 0)),
        out_shape=jax.ShapeDtypeStruct((n, h * wk, cout), jnp.float32),
        compiler_params=pltpu.CompilerParams(
            dimension_semantics=("parallel", "parallel"),
            vmem_limit_bytes=vmem_limit),
    )(y, scale, shift)

    # (N, H*Wk, Cout): reshape is free; crop padded columns if any; only a small
    # Cout-wide transpose remains when NCHW is requested.
    out_nhwc = out_flat.reshape(n, h, wk, cout)
    if wk != w:
        out_nhwc = out_nhwc[:, :, :w, :]
    if data_format == "NHWC":
        return out_nhwc
    return jnp.transpose(out_nhwc, (0, 3, 1, 2))


# ------------------------------- Reference ------------------------------------

def _reference(x, weight, gamma, beta, *, eps=1e-5, slope=0.01):
    # Match the kernel's bf16 input/weight quantization; conv/norm in f32.
    kh, kw = weight.shape[2], weight.shape[3]
    ph, pw = (kh - 1) // 2, (kw - 1) // 2
    xq = x.astype(jnp.bfloat16).astype(jnp.float32)
    wq = weight.astype(jnp.bfloat16).astype(jnp.float32)
    y = jax.lax.conv_general_dilated(
        xq, wq, window_strides=(1, 1), padding=((ph, ph), (pw, pw)),
        dimension_numbers=("NCHW", "OIHW", "NCHW"),
        precision=jax.lax.Precision.HIGHEST)
    mean = jnp.mean(y, axis=(2, 3), keepdims=True)
    var = jnp.mean((y - mean) ** 2, axis=(2, 3), keepdims=True)
    yn = (y - mean) * jax.lax.rsqrt(var + eps)
    yn = yn * gamma[None, :, None, None] + beta[None, :, None, None]
    return jnp.where(yn >= 0, yn, slope * yn)


# --------------------------------- Main ----------------------------------------

if __name__ == "__main__":
    key = jax.random.PRNGKey(0)
    k_x, k_w, k_g, k_b = jax.random.split(key, 4)

    N, Cin, H, W = 2, 4, 16, 16
    Cout, KH, KW = 8, 3, 3

    x = jax.random.normal(k_x, (N, Cin, H, W), dtype=jnp.float32)
    weight = 0.1 * jax.random.normal(k_w, (Cout, Cin, KH, KW), dtype=jnp.float32)
    gamma = 1.0 + 0.1 * jax.random.normal(k_g, (Cout,), dtype=jnp.float32)
    beta = 0.1 * jax.random.normal(k_b, (Cout,), dtype=jnp.float32)
    # conv_bias=False (module default) -> no bias; dropout_op=None -> identity.

    # tile_rows=4 -> 4 row tiles per sample split into 2 parallel chunks of 2:
    # exercises the resident stats accumulation AND the cross-chunk fold.
    out = conv_dropout_norm_relu(x, weight, gamma, beta, tile_rows=4)
    out = jax.block_until_ready(out)

    ref = _reference(x, weight, gamma, beta)
    assert out.shape == (N, Cout, H, W), out.shape
    max_err = float(jnp.max(jnp.abs(out - ref)))
    # bf16 storage of the conv intermediate bounds the error at ~|y|*2^-9*scale
    # (observed ~1e-2 worst case for these magnitudes); stats are exact f32.
    assert max_err < 2.5e-2, max_err

    print("KERNEL_OK")
</pallas_src>

<mosaic_0001>
module attributes {stable_mosaic.version = 11 : i64} {
  func.func @_conv_stats_kernel(%arg0: i32, %arg1: i32, %arg2: i32, %arg3: memref<1x288x12xbf16, #tpu.memory_space<vmem>>, %arg4: memref<3x12x128xbf16, #tpu.memory_space<vmem>>, %arg5: memref<1x64x128xbf16, #tpu.memory_space<vmem>>, %arg6: memref<1x1x8x128xf32, #tpu.memory_space<vmem>>, %arg7: memref<1x1x8x128xf32, #tpu.memory_space<vmem>>) attributes {dimension_semantics = [#tpu.dimension_semantics<parallel>, #tpu.dimension_semantics<parallel>, #tpu.dimension_semantics<arbitrary>], iteration_bounds = array<i64: 2, 2, 2>, scalar_prefetch = 0 : i64, scratch_operands = 0 : i64, tpu.core_type = #tpu.core_type<tc>, window_params = [{pipeline_mode = #tpu.pipeline_mode<synchronous>, transform_indices = @transform_0, window_bounds = array<i64: 1, 288, 12>}, {pipeline_mode = #tpu.pipeline_mode<synchronous>, transform_indices = @transform_1, window_bounds = array<i64: 3, 12, 128>}, {transform_indices = @transform_2, window_bounds = array<i64: 1, 64, 128>}, {transform_indices = @transform_3, window_bounds = array<i64: 1, 1, 8, 128>}, {transform_indices = @transform_4, window_bounds = array<i64: 1, 1, 8, 128>}]} {
    %c0_i32 = arith.constant 0 : i32
    %0 = arith.cmpi eq, %arg2, %c0_i32 : i32
    %1 = arith.extui %0 : i1 to i32
    %c0_i32_0 = arith.constant 0 : i32
    %2 = arith.cmpi ne, %1, %c0_i32_0 : i32
    scf.if %2 {
      %cst_41 = arith.constant 0.000000e+00 : f32
      %57 = vector.broadcast %cst_41 : f32 to vector<8x128xf32>
      %c0_42 = arith.constant 0 : index
      %c0_43 = arith.constant 0 : index
      %c0_44 = arith.constant 0 : index
      %c0_45 = arith.constant 0 : index
      %58 = vector.load %arg6[%c0_42, %c0_43, %c0_44, %c0_45] : memref<1x1x8x128xf32, #tpu.memory_space<vmem>>, vector<1x1x8x128xf32>
      %59 = vector.shape_cast %58 : vector<1x1x8x128xf32> to vector<8x128xf32>
      %60 = vector.shape_cast %57 : vector<8x128xf32> to vector<1x1x8x128xf32>
      tpu.vector_store %arg6[%c0_42, %c0_43, %c0_44, %c0_45], %60 {strides = array<i32>} : memref<1x1x8x128xf32, #tpu.memory_space<vmem>>, vector<1x1x8x128xf32>,
      %cst_46 = arith.constant 0.000000e+00 : f32
      %61 = vector.broadcast %cst_46 : f32 to vector<8x128xf32>
      %c0_47 = arith.constant 0 : index
      %c0_48 = arith.constant 0 : index
      %c0_49 = arith.constant 0 : index
      %c0_50 = arith.constant 0 : index
      %62 = vector.load %arg7[%c0_47, %c0_48, %c0_49, %c0_50] : memref<1x1x8x128xf32, #tpu.memory_space<vmem>>, vector<1x1x8x128xf32>
      %63 = vector.shape_cast %62 : vector<1x1x8x128xf32> to vector<8x128xf32>
      %64 = vector.shape_cast %61 : vector<8x128xf32> to vector<1x1x8x128xf32>
      tpu.vector_store %arg7[%c0_47, %c0_48, %c0_49, %c0_50], %64 {strides = array<i32>} : memref<1x1x8x128xf32, #tpu.memory_space<vmem>>, vector<1x1x8x128xf32>,
    } else {
    }
    %c2_i32 = arith.constant 2 : i32
    %3 = arith.muli %arg1, %c2_i32 : i32
    %4 = arith.addi %3, %arg2 : i32
    %c4_i32 = arith.constant 4 : i32
    %5 = arith.muli %4, %c4_i32 : i32
    %cst = arith.constant 0.000000e+00 : f32
    %6 = vector.broadcast %cst : f32 to vector<64x128xf32>
    %c0_i32_1 = arith.constant 0 : i32
    %7 = arith.addi %5, %c0_i32_1 : i32
    %c16_i32 = arith.constant 16 : i32
    %8 = arith.muli %7, %c16_i32 : i32
    %9 = tpu.assume_multiple %8, 8 : i32
    %c0 = arith.constant 0 : index
    %10 = arith.index_cast %9 : i32 to index
    %c0_2 = arith.constant 0 : index
    %11 = vector.load %arg3[%c0, %10, %c0_2] : memref<1x288x12xbf16, #tpu.memory_space<vmem>>, vector<1x64x12xbf16>
    %12 = vector.shape_cast %11 : vector<1x64x12xbf16> to vector<64x12xbf16>
    %c0_3 = arith.constant 0 : index
    %c0_4 = arith.constant 0 : index
    %c0_5 = arith.constant 0 : index
    %13 = vector.load %arg4[%c0_3, %c0_4, %c0_5] : memref<3x12x128xbf16, #tpu.memory_space<vmem>>, vector<1x12x128xbf16>
    %14 = vector.shape_cast %13 : vector<1x12x128xbf16> to vector<12x128xbf16>
    %cst_6 = arith.constant dense<0.000000e+00> : vector<64x128xf32>
    %15 = tpu.matmul %12, %14, %cst_6 {dimension_numbers = #tpu.dot_dimension_numbers<[1], [0], [0], [1], [0, 0, 1, 1], [], []>} : vector<64x12xbf16>, vector<12x128xbf16>, vector<64x128xf32> -> vector<64x128xf32>
    %16 = arith.addf %6, %15 : vector<64x128xf32>
    %c1_i32 = arith.constant 1 : i32
    %17 = arith.addi %5, %c1_i32 : i32
    %c16_i32_7 = arith.constant 16 : i32
    %18 = arith.muli %17, %c16_i32_7 : i32
    %19 = tpu.assume_multiple %18, 8 : i32
    %c0_8 = arith.constant 0 : index
    %20 = arith.index_cast %19 : i32 to index
    %c0_9 = arith.constant 0 : index
    %21 = vector.load %arg3[%c0_8, %20, %c0_9] : memref<1x288x12xbf16, #tpu.memory_space<vmem>>, vector<1x64x12xbf16>
    %22 = vector.shape_cast %21 : vector<1x64x12xbf16> to vector<64x12xbf16>
    %c1 = arith.constant 1 : index
    %c0_10 = arith.constant 0 : index
    %c0_11 = arith.constant 0 : index
    %23 = vector.load %arg4[%c1, %c0_10, %c0_11] : memref<3x12x128xbf16, #tpu.memory_space<vmem>>, vector<1x12x128xbf16>
    %24 = vector.shape_cast %23 : vector<1x12x128xbf16> to vector<12x128xbf16>
    %cst_12 = arith.constant dense<0.000000e+00> : vector<64x128xf32>
    %25 = tpu.matmul %22, %24, %cst_12 {dimension_numbers = #tpu.dot_dimension_numbers<[1], [0], [0], [1], [0, 0, 1, 1], [], []>} : vector<64x12xbf16>, vector<12x128xbf16>, vector<64x128xf32> -> vector<64x128xf32>
    %26 = arith.addf %16, %25 : vector<64x128xf32>
    %c2_i32_13 = arith.constant 2 : i32
    %27 = arith.addi %5, %c2_i32_13 : i32
    %c16_i32_14 = arith.constant 16 : i32
    %28 = arith.muli %27, %c16_i32_14 : i32
    %29 = tpu.assume_multiple %28, 8 : i32
    %c0_15 = arith.constant 0 : index
    %30 = arith.index_cast %29 : i32 to index
    %c0_16 = arith.constant 0 : index
    %31 = vector.load %arg3[%c0_15, %30, %c0_16] : memref<1x288x12xbf16, #tpu.memory_space<vmem>>, vector<1x64x12xbf16>
    %32 = vector.shape_cast %31 : vector<1x64x12xbf16> to vector<64x12xbf16>
    %c2 = arith.constant 2 : index
    %c0_17 = arith.constant 0 : index
    %c0_18 = arith.constant 0 : index
    %33 = vector.load %arg4[%c2, %c0_17, %c0_18] : memref<3x12x128xbf16, #tpu.memory_space<vmem>>, vector<1x12x128xbf16>
    %34 = vector.shape_cast %33 : vector<1x12x128xbf16> to vector<12x128xbf16>
    %cst_19 = arith.constant dense<0.000000e+00> : vector<64x128xf32>
    %35 = tpu.matmul %32, %34, %cst_19 {dimension_numbers = #tpu.dot_dimension_numbers<[1], [0], [0], [1], [0, 0, 1, 1], [], []>} : vector<64x12xbf16>, vector<12x128xbf16>, vector<64x128xf32> -> vector<64x128xf32>
    %36 = arith.addf %26, %35 : vector<64x128xf32>
    %37 = arith.truncf %36 : vector<64x128xf32> to vector<64x128xbf16>
    %c0_20 = arith.constant 0 : index
    %c0_21 = arith.constant 0 : index
    %c0_22 = arith.constant 0 : index
    %38 = vector.load %arg5[%c0_20, %c0_21, %c0_22] : memref<1x64x128xbf16, #tpu.memory_space<vmem>>, vector<1x64x128xbf16>
    %39 = vector.shape_cast %38 : vector<1x64x128xbf16> to vector<64x128xbf16>
    %40 = vector.shape_cast %37 : vector<64x128xbf16> to vector<1x64x128xbf16>
    tpu.vector_store %arg5[%c0_20, %c0_21, %c0_22], %40 {strides = array<i32>} : memref<1x64x128xbf16, #tpu.memory_space<vmem>>, vector<1x64x128xbf16>,
    %41 = vector.shape_cast %36 : vector<64x128xf32> to vector<8x8x128xf32>
    %c0_23 = arith.constant 0 : index
    %c0_24 = arith.constant 0 : index
    %c0_25 = arith.constant 0 : index
    %c0_26 = arith.constant 0 : index
    %42 = vector.load %arg6[%c0_23, %c0_24, %c0_25, %c0_26] : memref<1x1x8x128xf32, #tpu.memory_space<vmem>>, vector<1x1x8x128xf32>
    %43 = vector.shape_cast %42 : vector<1x1x8x128xf32> to vector<8x128xf32>
    %cst_27 = arith.constant dense<0.000000e+00> : vector<8x128xf32>
    %44 = vector.multi_reduction <add>, %41, %cst_27 [0] : vector<8x8x128xf32> to vector<8x128xf32>
    %45 = arith.addf %43, %44 : vector<8x128xf32>
    %c0_28 = arith.constant 0 : index
    %c0_29 = arith.constant 0 : index
    %c0_30 = arith.constant 0 : index
    %c0_31 = arith.constant 0 : index
    %46 = vector.load %arg6[%c0_28, %c0_29, %c0_30, %c0_31] : memref<1x1x8x128xf32, #tpu.memory_space<vmem>>, vector<1x1x8x128xf32>
    %47 = vector.shape_cast %46 : vector<1x1x8x128xf32> to vector<8x128xf32>
    %48 = vector.shape_cast %45 : vector<8x128xf32> to vector<1x1x8x128xf32>
    tpu.vector_store %arg6[%c0_28, %c0_29, %c0_30, %c0_31], %48 {strides = array<i32>} : memref<1x1x8x128xf32, #tpu.memory_space<vmem>>, vector<1x1x8x128xf32>,
    %c0_32 = arith.constant 0 : index
    %c0_33 = arith.constant 0 : index
    %c0_34 = arith.constant 0 : index
    %c0_35 = arith.constant 0 : index
    %49 = vector.load %arg7[%c0_32, %c0_33, %c0_34, %c0_35] : memref<1x1x8x128xf32, #tpu.memory_space<vmem>>, vector<1x1x8x128xf32>
    %50 = vector.shape_cast %49 : vector<1x1x8x128xf32> to vector<8x128xf32>
    %51 = arith.mulf %41, %41 : vector<8x8x128xf32>
    %cst_36 = arith.constant dense<0.000000e+00> : vector<8x128xf32>
    %52 = vector.multi_reduction <add>, %51, %cst_36 [0] : vector<8x8x128xf32> to vector<8x128xf32>
    %53 = arith.addf %50, %52 : vector<8x128xf32>
    %c0_37 = arith.constant 0 : index
    %c0_38 = arith.constant 0 : index
    %c0_39 = arith.constant 0 : index
    %c0_40 = arith.constant 0 : index
    %54 = vector.load %arg7[%c0_37, %c0_38, %c0_39, %c0_40] : memref<1x1x8x128xf32, #tpu.memory_space<vmem>>, vector<1x1x8x128xf32>
    %55 = vector.shape_cast %54 : vector<1x1x8x128xf32> to vector<8x128xf32>
    %56 = vector.shape_cast %53 : vector<8x128xf32> to vector<1x1x8x128xf32>
    tpu.vector_store %arg7[%c0_37, %c0_38, %c0_39, %c0_40], %56 {strides = array<i32>} : memref<1x1x8x128xf32, #tpu.memory_space<vmem>>, vector<1x1x8x128xf32>,
    return
  }
  func.func @transform_0(%arg0: i32, %arg1: i32, %arg2: i32) -> (i32, i32, i32) {
    %c0_i32 = arith.constant 0 : i32
    %c0_i32_0 = arith.constant 0 : i32
    %c0_i32_1 = arith.constant 0 : i32
    return %arg0, %c0_i32, %c0_i32_0 : i32, i32, i32
  }
  func.func @transform_1(%arg0: i32, %arg1: i32, %arg2: i32) -> (i32, i32, i32) {
    %c0_i32 = arith.constant 0 : i32
    %c0_i32_0 = arith.constant 0 : i32
    %c0_i32_1 = arith.constant 0 : i32
    %c0_i32_2 = arith.constant 0 : i32
    return %c0_i32, %c0_i32_0, %c0_i32_1 : i32, i32, i32
  }
  func.func @transform_2(%arg0: i32, %arg1: i32, %arg2: i32) -> (i32, i32, i32) {
    %c2_i32 = arith.constant 2 : i32
    %0 = arith.muli %arg1, %c2_i32 : i32
    %1 = arith.addi %0, %arg2 : i32
    %c0_i32 = arith.constant 0 : i32
    %c0_i32_0 = arith.constant 0 : i32
    return %arg0, %1, %c0_i32 : i32, i32, i32
  }
  func.func @transform_3(%arg0: i32, %arg1: i32, %arg2: i32) -> (i32, i32, i32, i32) {
    %c0_i32 = arith.constant 0 : i32
    %c0_i32_0 = arith.constant 0 : i32
    %c0_i32_1 = arith.constant 0 : i32
    return %arg0, %arg1, %c0_i32, %c0_i32_0 : i32, i32, i32, i32
  }
  func.func @transform_4(%arg0: i32, %arg1: i32, %arg2: i32) -> (i32, i32, i32, i32) {
    %c0_i32 = arith.constant 0 : i32
    %c0_i32_0 = arith.constant 0 : i32
    %c0_i32_1 = arith.constant 0 : i32
    return %arg0, %arg1, %c0_i32, %c0_i32_0 : i32, i32, i32, i32
  }
}

module attributes {stable_mosaic.version = 11 : i64} {
  func.func @_conv_stats_kernel(%arg0: i32, %arg1: i32, %arg2: i32, %arg3: memref<1x288x12xbf16, #tpu.memory_space<vmem>>, %arg4: memref<3x12x128xbf16, #tpu.memory_space<vmem>>, %arg5: memref<1x64x128xbf16, #tpu.memory_space<vmem>>, %arg6: memref<1x1x8x128xf32, #tpu.memory_space<vmem>>, %arg7: memref<1x1x8x128xf32, #tpu.memory_space<vmem>>) attributes {dimension_semantics = [#tpu.dimension_semantics<parallel>, #tpu.dimension_semantics<parallel>, #tpu.dimension_semantics<arbitrary>], iteration_bounds = array<i64: 2, 2, 2>, scalar_prefetch = 0 : i64, scratch_operands = 0 : i64, tpu.core_type = #tpu.core_type<tc>, window_params = [{transform_indices = @transform_0, window_bounds = array<i64: 1, 288, 12>}, {pipeline_mode = #tpu.pipeline_mode<synchronous>, transform_indices = @transform_1, window_bounds = array<i64: 3, 12, 128>}, {transform_indices = @transform_2, window_bounds = array<i64: 1, 64, 128>}, {transform_indices = @transform_3, window_bounds = array<i64: 1, 1, 8, 128>}, {transform_indices = @transform_4, window_bounds = array<i64: 1, 1, 8, 128>}]} {
    %c0_i32 = arith.constant 0 : i32
    %0 = arith.cmpi eq, %arg2, %c0_i32 : i32
    %1 = arith.extui %0 : i1 to i32
    %c0_i32_0 = arith.constant 0 : i32
    %2 = arith.cmpi ne, %1, %c0_i32_0 : i32
    scf.if %2 {
      %cst_41 = arith.constant 0.000000e+00 : f32
      %57 = vector.broadcast %cst_41 : f32 to vector<8x128xf32>
      %c0_42 = arith.constant 0 : index
      %c0_43 = arith.constant 0 : index
      %c0_44 = arith.constant 0 : index
      %c0_45 = arith.constant 0 : index
      %58 = vector.load %arg6[%c0_42, %c0_43, %c0_44, %c0_45] : memref<1x1x8x128xf32, #tpu.memory_space<vmem>>, vector<1x1x8x128xf32>
      %59 = vector.shape_cast %58 : vector<1x1x8x128xf32> to vector<8x128xf32>
      %60 = vector.shape_cast %57 : vector<8x128xf32> to vector<1x1x8x128xf32>
      tpu.vector_store %arg6[%c0_42, %c0_43, %c0_44, %c0_45], %60 {strides = array<i32>} : memref<1x1x8x128xf32, #tpu.memory_space<vmem>>, vector<1x1x8x128xf32>,
      %cst_46 = arith.constant 0.000000e+00 : f32
      %61 = vector.broadcast %cst_46 : f32 to vector<8x128xf32>
      %c0_47 = arith.constant 0 : index
      %c0_48 = arith.constant 0 : index
      %c0_49 = arith.constant 0 : index
      %c0_50 = arith.constant 0 : index
      %62 = vector.load %arg7[%c0_47, %c0_48, %c0_49, %c0_50] : memref<1x1x8x128xf32, #tpu.memory_space<vmem>>, vector<1x1x8x128xf32>
      %63 = vector.shape_cast %62 : vector<1x1x8x128xf32> to vector<8x128xf32>
      %64 = vector.shape_cast %61 : vector<8x128xf32> to vector<1x1x8x128xf32>
      tpu.vector_store %arg7[%c0_47, %c0_48, %c0_49, %c0_50], %64 {strides = array<i32>} : memref<1x1x8x128xf32, #tpu.memory_space<vmem>>, vector<1x1x8x128xf32>,
    } else {
    }
    %c2_i32 = arith.constant 2 : i32
    %3 = arith.muli %arg1, %c2_i32 : i32
    %4 = arith.addi %3, %arg2 : i32
    %c4_i32 = arith.constant 4 : i32
    %5 = arith.muli %4, %c4_i32 : i32
    %cst = arith.constant 0.000000e+00 : f32
    %6 = vector.broadcast %cst : f32 to vector<64x128xf32>
    %c0_i32_1 = arith.constant 0 : i32
    %7 = arith.addi %5, %c0_i32_1 : i32
    %c16_i32 = arith.constant 16 : i32
    %8 = arith.muli %7, %c16_i32 : i32
    %9 = tpu.assume_multiple %8, 8 : i32
    %c0 = arith.constant 0 : index
    %10 = arith.index_cast %9 : i32 to index
    %c0_2 = arith.constant 0 : index
    %11 = vector.load %arg3[%c0, %10, %c0_2] : memref<1x288x12xbf16, #tpu.memory_space<vmem>>, vector<1x64x12xbf16>
    %12 = vector.shape_cast %11 : vector<1x64x12xbf16> to vector<64x12xbf16>
    %c0_3 = arith.constant 0 : index
    %c0_4 = arith.constant 0 : index
    %c0_5 = arith.constant 0 : index
    %13 = vector.load %arg4[%c0_3, %c0_4, %c0_5] : memref<3x12x128xbf16, #tpu.memory_space<vmem>>, vector<1x12x128xbf16>
    %14 = vector.shape_cast %13 : vector<1x12x128xbf16> to vector<12x128xbf16>
    %cst_6 = arith.constant dense<0.000000e+00> : vector<64x128xf32>
    %15 = tpu.matmul %12, %14, %cst_6 {dimension_numbers = #tpu.dot_dimension_numbers<[1], [0], [0], [1], [0, 0, 1, 1], [], []>} : vector<64x12xbf16>, vector<12x128xbf16>, vector<64x128xf32> -> vector<64x128xf32>
    %16 = arith.addf %6, %15 : vector<64x128xf32>
    %c1_i32 = arith.constant 1 : i32
    %17 = arith.addi %5, %c1_i32 : i32
    %c16_i32_7 = arith.constant 16 : i32
    %18 = arith.muli %17, %c16_i32_7 : i32
    %19 = tpu.assume_multiple %18, 8 : i32
    %c0_8 = arith.constant 0 : index
    %20 = arith.index_cast %19 : i32 to index
    %c0_9 = arith.constant 0 : index
    %21 = vector.load %arg3[%c0_8, %20, %c0_9] : memref<1x288x12xbf16, #tpu.memory_space<vmem>>, vector<1x64x12xbf16>
    %22 = vector.shape_cast %21 : vector<1x64x12xbf16> to vector<64x12xbf16>
    %c1 = arith.constant 1 : index
    %c0_10 = arith.constant 0 : index
    %c0_11 = arith.constant 0 : index
    %23 = vector.load %arg4[%c1, %c0_10, %c0_11] : memref<3x12x128xbf16, #tpu.memory_space<vmem>>, vector<1x12x128xbf16>
    %24 = vector.shape_cast %23 : vector<1x12x128xbf16> to vector<12x128xbf16>
    %cst_12 = arith.constant dense<0.000000e+00> : vector<64x128xf32>
    %25 = tpu.matmul %22, %24, %cst_12 {dimension_numbers = #tpu.dot_dimension_numbers<[1], [0], [0], [1], [0, 0, 1, 1], [], []>} : vector<64x12xbf16>, vector<12x128xbf16>, vector<64x128xf32> -> vector<64x128xf32>
    %26 = arith.addf %16, %25 : vector<64x128xf32>
    %c2_i32_13 = arith.constant 2 : i32
    %27 = arith.addi %5, %c2_i32_13 : i32
    %c16_i32_14 = arith.constant 16 : i32
    %28 = arith.muli %27, %c16_i32_14 : i32
    %29 = tpu.assume_multiple %28, 8 : i32
    %c0_15 = arith.constant 0 : index
    %30 = arith.index_cast %29 : i32 to index
    %c0_16 = arith.constant 0 : index
    %31 = vector.load %arg3[%c0_15, %30, %c0_16] : memref<1x288x12xbf16, #tpu.memory_space<vmem>>, vector<1x64x12xbf16>
    %32 = vector.shape_cast %31 : vector<1x64x12xbf16> to vector<64x12xbf16>
    %c2 = arith.constant 2 : index
    %c0_17 = arith.constant 0 : index
    %c0_18 = arith.constant 0 : index
    %33 = vector.load %arg4[%c2, %c0_17, %c0_18] : memref<3x12x128xbf16, #tpu.memory_space<vmem>>, vector<1x12x128xbf16>
    %34 = vector.shape_cast %33 : vector<1x12x128xbf16> to vector<12x128xbf16>
    %cst_19 = arith.constant dense<0.000000e+00> : vector<64x128xf32>
    %35 = tpu.matmul %32, %34, %cst_19 {dimension_numbers = #tpu.dot_dimension_numbers<[1], [0], [0], [1], [0, 0, 1, 1], [], []>} : vector<64x12xbf16>, vector<12x128xbf16>, vector<64x128xf32> -> vector<64x128xf32>
    %36 = arith.addf %26, %35 : vector<64x128xf32>
    %37 = arith.truncf %36 : vector<64x128xf32> to vector<64x128xbf16>
    %c0_20 = arith.constant 0 : index
    %c0_21 = arith.constant 0 : index
    %c0_22 = arith.constant 0 : index
    %38 = vector.load %arg5[%c0_20, %c0_21, %c0_22] : memref<1x64x128xbf16, #tpu.memory_space<vmem>>, vector<1x64x128xbf16>
    %39 = vector.shape_cast %38 : vector<1x64x128xbf16> to vector<64x128xbf16>
    %40 = vector.shape_cast %37 : vector<64x128xbf16> to vector<1x64x128xbf16>
    tpu.vector_store %arg5[%c0_20, %c0_21, %c0_22], %40 {strides = array<i32>} : memref<1x64x128xbf16, #tpu.memory_space<vmem>>, vector<1x64x128xbf16>,
    %41 = vector.shape_cast %36 : vector<64x128xf32> to vector<8x8x128xf32>
    %c0_23 = arith.constant 0 : index
    %c0_24 = arith.constant 0 : index
    %c0_25 = arith.constant 0 : index
    %c0_26 = arith.constant 0 : index
    %42 = vector.load %arg6[%c0_23, %c0_24, %c0_25, %c0_26] : memref<1x1x8x128xf32, #tpu.memory_space<vmem>>, vector<1x1x8x128xf32>
    %43 = vector.shape_cast %42 : vector<1x1x8x128xf32> to vector<8x128xf32>
    %cst_27 = arith.constant dense<0.000000e+00> : vector<8x128xf32>
    %44 = vector.multi_reduction <add>, %41, %cst_27 [0] : vector<8x8x128xf32> to vector<8x128xf32>
    %45 = arith.addf %43, %44 : vector<8x128xf32>
    %c0_28 = arith.constant 0 : index
    %c0_29 = arith.constant 0 : index
    %c0_30 = arith.constant 0 : index
    %c0_31 = arith.constant 0 : index
    %46 = vector.load %arg6[%c0_28, %c0_29, %c0_30, %c0_31] : memref<1x1x8x128xf32, #tpu.memory_space<vmem>>, vector<1x1x8x128xf32>
    %47 = vector.shape_cast %46 : vector<1x1x8x128xf32> to vector<8x128xf32>
    %48 = vector.shape_cast %45 : vector<8x128xf32> to vector<1x1x8x128xf32>
    tpu.vector_store %arg6[%c0_28, %c0_29, %c0_30, %c0_31], %48 {strides = array<i32>} : memref<1x1x8x128xf32, #tpu.memory_space<vmem>>, vector<1x1x8x128xf32>,
    %c0_32 = arith.constant 0 : index
    %c0_33 = arith.constant 0 : index
    %c0_34 = arith.constant 0 : index
    %c0_35 = arith.constant 0 : index
    %49 = vector.load %arg7[%c0_32, %c0_33, %c0_34, %c0_35] : memref<1x1x8x128xf32, #tpu.memory_space<vmem>>, vector<1x1x8x128xf32>
    %50 = vector.shape_cast %49 : vector<1x1x8x128xf32> to vector<8x128xf32>
    %51 = arith.mulf %41, %41 : vector<8x8x128xf32>
    %cst_36 = arith.constant dense<0.000000e+00> : vector<8x128xf32>
    %52 = vector.multi_reduction <add>, %51, %cst_36 [0] : vector<8x8x128xf32> to vector<8x128xf32>
    %53 = arith.addf %50, %52 : vector<8x128xf32>
    %c0_37 = arith.constant 0 : index
    %c0_38 = arith.constant 0 : index
    %c0_39 = arith.constant 0 : index
    %c0_40 = arith.constant 0 : index
    %54 = vector.load %arg7[%c0_37, %c0_38, %c0_39, %c0_40] : memref<1x1x8x128xf32, #tpu.memory_space<vmem>>, vector<1x1x8x128xf32>
    %55 = vector.shape_cast %54 : vector<1x1x8x128xf32> to vector<8x128xf32>
    %56 = vector.shape_cast %53 : vector<8x128xf32> to vector<1x1x8x128xf32>
    tpu.vector_store %arg7[%c0_37, %c0_38, %c0_39, %c0_40], %56 {strides = array<i32>} : memref<1x1x8x128xf32, #tpu.memory_space<vmem>>, vector<1x1x8x128xf32>,
    return
  }
  func.func @transform_0(%arg0: i32, %arg1: i32, %arg2: i32) -> (i32, i32, i32) {
    %c0_i32 = arith.constant 0 : i32
    %c0_i32_0 = arith.constant 0 : i32
    %c0_i32_1 = arith.constant 0 : i32
    return %arg0, %c0_i32, %c0_i32_0 : i32, i32, i32
  }
  func.func @transform_1(%arg0: i32, %arg1: i32, %arg2: i32) -> (i32, i32, i32) {
    %c0_i32 = arith.constant 0 : i32
    %c0_i32_0 = arith.constant 0 : i32
    %c0_i32_1 = arith.constant 0 : i32
    %c0_i32_2 = arith.constant 0 : i32
    return %c0_i32, %c0_i32_0, %c0_i32_1 : i32, i32, i32
  }
  func.func @transform_2(%arg0: i32, %arg1: i32, %arg2: i32) -> (i32, i32, i32) {
    %c2_i32 = arith.constant 2 : i32
    %0 = arith.muli %arg1, %c2_i32 : i32
    %1 = arith.addi %0, %arg2 : i32
    %c0_i32 = arith.constant 0 : i32
    %c0_i32_0 = arith.constant 0 : i32
    return %arg0, %1, %c0_i32 : i32, i32, i32
  }
  func.func @transform_3(%arg0: i32, %arg1: i32, %arg2: i32) -> (i32, i32, i32, i32) {
    %c0_i32 = arith.constant 0 : i32
    %c0_i32_0 = arith.constant 0 : i32
    %c0_i32_1 = arith.constant 0 : i32
    return %arg0, %arg1, %c0_i32, %c0_i32_0 : i32, i32, i32, i32
  }
  func.func @transform_4(%arg0: i32, %arg1: i32, %arg2: i32) -> (i32, i32, i32, i32) {
    %c0_i32 = arith.constant 0 : i32
    %c0_i32_0 = arith.constant 0 : i32
    %c0_i32_1 = arith.constant 0 : i32
    return %arg0, %arg1, %c0_i32, %c0_i32_0 : i32, i32, i32, i32
  }
}

</mosaic_0001>

<llo_original>
// kernel: tpu_custom_call.1
$region0: #{tpu_custom_call.1}
  #allocation0 [shape = 'u32[]', space=smem, size = 0x4, offset = 0x4, fixed_abs, tag = 'smem constant byte address 0x4 - core index']
  #allocation1 [shape = 'u32[144,128]{1,0:T(1,128)}', space=vmem, size = 0x12000, scoped, tag = 'internal scratch']
  %s0 = inlined_call_operand.vmem [shape: bf16[2,288,12], index: 0, kind: input, shape index: {}]
  %s1 = inlined_call_operand.vmem [shape: bf16[3,12,128], index: 1, kind: input, shape index: {}]
  %s2 = inlined_call_operand.hbm [shape: bf16[2,256,128], index: 2, kind: output, shape index: {0}]
  %s3 = inlined_call_operand.hbm [shape: f32[2,2,8,128], index: 3, kind: output, shape index: {1}]
  %s4 = inlined_call_operand.hbm [shape: f32[2,2,8,128], index: 4, kind: output, shape index: {2}]
  %5 = xla_tuple %s2, %s3, %s4
  %s6 = sld [smem:[#allocation0]]
  $region61: #{tpu_custom_call.1} parent=0
    _
  %s8 = ssub.s32 1, %s6
  %s9 = scalar_select 0, %s8, %s6
  $region1: #{tpu_custom_call.1} parent=0
    #allocation2 [shape = 'u8[32768]{0}', space=vmem, size = 0x8000, scoped, tag = 'output window, operand 0']
    #allocation3 [shape = 's32[2]{0}', space=sflag, size = 0x8, scoped, tag = 'scoped memory for tpu_custom_call.1']
    #allocation4 [shape = 'u8[8192]{0}', space=vmem, size = 0x2000, scoped, tag = 'output window, operand 1']
    #allocation5 [shape = 's32[2]{0}', space=sflag, size = 0x8, scoped, tag = 'scoped memory for tpu_custom_call.1']
    #allocation6 [shape = 'u8[8192]{0}', space=vmem, size = 0x2000, scoped, tag = 'output window, operand 2']
    %10 = vsyncpa [#allocation3], 0
    %s11 = scalar_lea.sflag [#allocation3], 1
    %12 = vsyncpa %s11, 0
    %13 = vsyncpa [#allocation5], 0
    %s14 = scalar_lea.sflag [#allocation5], 1
    %15 = vsyncpa %s14, 0
    loop: start=0, step=1, limit=10
    $region2: #{tpu_custom_call.1} parent=1 // loop_pre_header
      _
    $region3: #{tpu_custom_call.1} parent=1 // loop_header
      %s17 = sphi 0, %s21
      %p18 = scmp.ge.s32.totalorder %s17, 10
      %s24 = sphi 0, %s43
      %s25 = sphi 0, %s39
      %s26 = sphi 0, %s35
      %s27 = sphi 0, %s24
      %s28 = sphi 0, %s25
      %s29 = sphi 0, %s26
      %s30 = sphi 0, %s27
      %s31 = sphi 0, %s28
      %s32 = sphi 0, %s29
      %s46 = sphi 0, %s48
      %s49 = sphi 0, %s46
      %s50 = sphi 0, %s49
      %s66 = sphi 0, %s50
      %s70 = sphi 0, %s70
      %s72 = sphi 0, %s70
      %s73 = sphi 0, %s72
      %s87 = sphi 0, %s73
      %s99 = sphi 0, %s101
      %s102 = sphi 0, %s99
      %s103 = sphi 0, %s102
      %s119 = sphi 0, %s103
      %s127 = sphi 0, %s129
      %s130 = sphi 0, %s127
      %s131 = sphi 0, %s130
      %s147 = sphi 0, %s131
      %s155 = sphi 0, %s157
      %s158 = sphi 0, %s155
      %s159 = sphi 0, %s158
      %s175 = sphi 0, %s159
    $region4: #{tpu_custom_call.1} parent=1 // loop_header_branch
      %20 = sbr.rel (%p18) target = $region8
    $region5: #{tpu_custom_call.1} parent=1 // loop_body
      %s22 = ssub.s32 %s17, 1
      %s23 = ssub.s32 %s17, 2
      %s33 = sadd.s32 1, %s26
      %p34 = scmp.ge.s32.totalorder %s33, 2
      %s35 = scalar_select %p34, 0, %s33
      %s36 = sadd.s32 1, %s25
      %s37 = scalar_select %p34, %s36, %s25
      %p38 = scmp.ge.s32.totalorder %s37, 2
      %s39 = scalar_select %p38, 0, %s37
      %s40 = sadd.s32 1, %s24
      %s41 = scalar_select %p38, %s40, %s24
      %p42 = scmp.ge.s32.totalorder %s41, 2
      %s43 = scalar_select %p42, 0, %s41
      %s44 = ssub.s32 %s24, %s43
      %p45 = scmp.eq.s32.totalorder %s44, 0
      %s47 = sadd.s32 %s46, 1
      %s48 = scalar_select %p45, %s46, %s47
      %p51 = pneg %p45
      %p52 = scmp.eq.s32.totalorder %s17, 7
      %p53 = por %p51, %p52
      %p54 = scmp.ne.s32.totalorder %s46, %s49
      %p55 = scmp.eq.s32.totalorder %s17, 0
      %p56 = por %p54, %p55
      %p57 = scmp.ne.s32.totalorder %s46, %s49
      %p58 = scmp.eq.s32.totalorder %s22, 7
      %p59 = por %p57, %p58
      %p60 = scmp.ne.s32.totalorder %s49, %s50
      %p61 = scmp.eq.s32.totalorder %s22, 0
      %p62 = por %p60, %p61
      %p63 = scmp.ne.s32.totalorder %s49, %s50
      %p64 = scmp.eq.s32.totalorder %s23, 7
      %p65 = por %p63, %p64
      %p67 = scmp.ne.s32.totalorder %s50, %s66
      %p68 = scmp.eq.s32.totalorder %s23, 0
      %p69 = por %p67, %p68
      %s71 = sadd.s32 %s70, 1
      %p74 = scmp.eq.s32.totalorder %s17, 7
      %p75 = scmp.ne.s32.totalorder %s70, %s72
      %p76 = scmp.eq.s32.totalorder %s17, 0
      %p77 = por %p75, %p76
      %p78 = scmp.ne.s32.totalorder %s70, %s72
      %p79 = scmp.eq.s32.totalorder %s22, 7
      %p80 = por %p78, %p79
      %p81 = scmp.ne.s32.totalorder %s72, %s73
      %p82 = scmp.eq.s32.totalorder %s22, 0
      %p83 = por %p81, %p82
      %p84 = scmp.ne.s32.totalorder %s72, %s73
      %p85 = scmp.eq.s32.totalorder %s23, 7
      %p86 = por %p84, %p85
      %p88 = scmp.ne.s32.totalorder %s73, %s87
      %p89 = scmp.eq.s32.totalorder %s23, 0
      %p90 = por %p88, %p89
      %s91 = smul.u32 %s25, 2
      %s92 = sadd.s32 %s91, %s26
      %s93 = smul.u32 %s39, 2
      %s94 = sadd.s32 %s93, %s35
      %s95 = ssub.s32 %s24, %s43
      %s96 = ssub.s32 %s92, %s94
      %s97 = sor.u32 %s95, %s96
      %p98 = scmp.eq.s32.totalorder %s97, 0
      %s100 = sadd.s32 %s99, 1
      %s101 = scalar_select %p98, %s99, %s100
      %p104 = pneg %p98
      %p105 = scmp.eq.s32.totalorder %s17, 7
      %p106 = por %p104, %p105
      %p107 = scmp.ne.s32.totalorder %s99, %s102
      %p108 = scmp.eq.s32.totalorder %s17, 0
      %p109 = por %p107, %p108
      %p110 = scmp.ne.s32.totalorder %s99, %s102
      %p111 = scmp.eq.s32.totalorder %s22, 7
      %p112 = por %p110, %p111
      %p113 = scmp.ne.s32.totalorder %s102, %s103
      %p114 = scmp.eq.s32.totalorder %s22, 0
      %p115 = por %p113, %p114
      %p116 = scmp.ne.s32.totalorder %s102, %s103
      %p117 = scmp.eq.s32.totalorder %s23, 7
      %p118 = por %p116, %p117
      %p120 = scmp.ne.s32.totalorder %s103, %s119
      %p121 = scmp.eq.s32.totalorder %s23, 0
      %p122 = por %p120, %p121
      %s123 = ssub.s32 %s24, %s43
      %s124 = ssub.s32 %s25, %s39
      %s125 = sor.u32 %s123, %s124
      %p126 = scmp.eq.s32.totalorder %s125, 0
      %s128 = sadd.s32 %s127, 1
      %s129 = scalar_select %p126, %s127, %s128
      %p132 = pneg %p126
      %p133 = scmp.eq.s32.totalorder %s17, 7
      %p134 = por %p132, %p133
      %p135 = scmp.ne.s32.totalorder %s127, %s130
      %p136 = scmp.eq.s32.totalorder %s17, 0
      %p137 = por %p135, %p136
      %p138 = scmp.ne.s32.totalorder %s127, %s130
      %p139 = scmp.eq.s32.totalorder %s22, 7
      %p140 = por %p138, %p139
      %p141 = scmp.ne.s32.totalorder %s130, %s131
      %p142 = scmp.eq.s32.totalorder %s22, 0
      %p143 = por %p141, %p142
      %p144 = scmp.ne.s32.totalorder %s130, %s131
      %p145 = scmp.eq.s32.totalorder %s23, 7
      %p146 = por %p144, %p145
      %p148 = scmp.ne.s32.totalorder %s131, %s147
      %p149 = scmp.eq.s32.totalorder %s23, 0
      %p150 = por %p148, %p149
      %s151 = ssub.s32 %s24, %s43
      %s152 = ssub.s32 %s25, %s39
      %s153 = sor.u32 %s151, %s152
      %p154 = scmp.eq.s32.totalorder %s153, 0
      %s156 = sadd.s32 %s155, 1
      %s157 = scalar_select %p154, %s155, %s156
      %p160 = pneg %p154
      %p161 = scmp.eq.s32.totalorder %s17, 7
      %p162 = por %p160, %p161
      %p163 = scmp.ne.s32.totalorder %s155, %s158
      %p164 = scmp.eq.s32.totalorder %s17, 0
      %p165 = por %p163, %p164
      %p166 = scmp.ne.s32.totalorder %s155, %s158
      %p167 = scmp.eq.s32.totalorder %s22, 7
      %p168 = por %p166, %p167
      %p169 = scmp.ne.s32.totalorder %s158, %s159
      %p170 = scmp.eq.s32.totalorder %s22, 0
      %p171 = por %p169, %p170
      %p172 = scmp.ne.s32.totalorder %s158, %s159
      %p173 = scmp.eq.s32.totalorder %s23, 7
      %p174 = por %p172, %p173
      %p176 = scmp.ne.s32.totalorder %s159, %s175
      %p177 = scmp.eq.s32.totalorder %s23, 0
      %p178 = por %p176, %p177
      %p179 = scmp.le.s32.totalorder 1, %s17
      %p180 = scmp.lt.s32.totalorder %s17, 9
      %p181 = pnand %p179, %p180
      %p182 = pneg %p181
      // Predicated region
      $region9: #{tpu_custom_call.1} parent=5 // pred_check
        _
      $region10: #{tpu_custom_call.1} parent=5 // pred_check_branch
        %184 = sbr.rel (%p181) target = $region12
      $region11: #{tpu_custom_call.1} parent=5 // pred_region
        %s185 = ssub.s32 %s17, 1
        // Predicated region
        $region13: #{tpu_custom_call.1} parent=11 // pred_check
          %p186 = pneg %p62
        $region14: #{tpu_custom_call.1} parent=11 // pred_check_branch
          %188 = sbr.rel (%p186) target = $region16
        $region15: #{tpu_custom_call.1} parent=11 // pred_region
          %p189 = scmp.lt.s32.totalorder %s27, 1
          %s190 = scalar_select %p189, %s27, 1
          %s191 = smul.addr %s190, 36
          %s192 = smul.addr %s191, 4
          %s193 = scalar_lea.vmem %s0, %s192
        $region16: #{tpu_custom_call.1} parent=11 // pred_fallthru
          _
        // Predicated region
        $region17: #{tpu_custom_call.1} parent=11 // pred_check
          %p194 = pneg %p83
        $region18: #{tpu_custom_call.1} parent=11 // pred_check_branch
          %196 = sbr.rel (%p194) target = $region20
        $region19: #{tpu_custom_call.1} parent=11 // pred_region
          _
        $region20: #{tpu_custom_call.1} parent=11 // pred_fallthru
          _
      $region12: #{tpu_custom_call.1} parent=5 // pred_fallthru
        _
      %p197 = scmp.lt.s32.totalorder %s17, 8
      // Predicated region
      $region21: #{tpu_custom_call.1} parent=5 // pred_check
        %p198 = pneg %p197
      $region22: #{tpu_custom_call.1} parent=5 // pred_check_branch
        %200 = sbr.rel (%p198) target = $region24
      $region23: #{tpu_custom_call.1} parent=5 // pred_region
        _
      $region24: #{tpu_custom_call.1} parent=5 // pred_fallthru
        _
      %p201 = scmp.le.s32.totalorder 1, %s17
      %p202 = scmp.lt.s32.totalorder %s17, 9
      %p203 = pnand %p201, %p202
      %p204 = pneg %p203
      // Predicated region
      $region25: #{tpu_custom_call.1} parent=5 // pred_check
        _
      $region26: #{tpu_custom_call.1} parent=5 // pred_check_branch
        %206 = sbr.rel (%p203) target = $region28
      $region27: #{tpu_custom_call.1} parent=5 // pred_region
        %s207 = ssub.s32 %s17, 1
        %p208 = scmp.lt.s32.totalorder %s27, 1
        %s209 = scalar_select %p208, %s27, 1
        %s210 = smul.addr %s209, 36
        %s211 = smul.addr %s210, 4
        %s212 = scalar_lea.vmem %s0, %s211
        %p213 = pneg %p62
        %p214 = pneg %p59
        %p215 = pneg %p83
        %p216 = pneg %p80
        %p217 = pneg %p115
        %p218 = pneg %p112
        %s219 = sand.u32 %s102, 1
        %s220 = scalar_lea.sflag [#allocation3], %s219
        %s221 = sand.u32 %s102, 1
        %s222 = smul.addr %s221, 32
        %s223 = scalar_lea.vmem [#allocation2], %s222
        %p224 = pneg %p143
        %p225 = pneg %p140
        %s226 = sand.u32 %s22, 1
        %s227 = scalar_lea.sflag [#allocation5], %s226
        %s228 = sand.u32 %s130, 1
        %s229 = smul.addr %s228, 8
        %s230 = scalar_lea.vmem [#allocation4], %s229
        %p231 = pneg %p171
        %p232 = pneg %p168
        %s233 = sand.u32 %s22, 1
        %s234 = scalar_lea.sflag [#allocation5], %s233
        %s235 = sand.u32 %s158, 1
        %s236 = smul.addr %s235, 8
        %s237 = scalar_lea.vmem [#allocation6], %s236
        %p238 = scmp.lt.s32.totalorder %s27, 1
        %s239 = scalar_select %p238, %s27, 1
        %s240 = smul.addr %s239, 36
        %s241 = smul.addr %s240, 4
        %s242 = scalar_lea.vmem %s0, %s241
        %s243 = smul.u32 %s28, 2
        %s244 = sadd.s32 %s243, %s29
        %s245 = smul.u32 8, %s244
        %p247 = scmp.eq.s32.totalorder %s29, 0
        // Predicated region
        $region29: #{tpu_custom_call.1} parent=27 // pred_check
          %p248 = pneg %p247
        $region30: #{tpu_custom_call.1} parent=27 // pred_check_branch
          %250 = sbr.rel (%p248) target = $region32
        $region31: #{tpu_custom_call.1} parent=27 // pred_region
          %251 = vst [vmem:[%s230] sm:$0xff] 0.0
          %252 = vst [vmem:[%s237] sm:$0xff] 0.0
        $region32: #{tpu_custom_call.1} parent=27 // pred_fallthru
          _
        %s253 = smul.u32 %s28, 2
        %s254 = sadd.s32 %s253, %s29
        %s255 = smul.u32 %s254, 4
        %s256 = smul.u32 %s254, 64
        %s257 = sshra.s32 %s256, 3
        %s258 = sand.u32 %s256, 7
        %s259 = smul.addr %s257, 4
        %s260 = scalar_lea.vmem %s242, %s259
        %v261 = vld [vmem:[%s260] sm:$0xf]
        %v262 = vld [vmem:[%s260 + $0x4] sm:$0xf]
        %v263 = vld [vmem:[%s260 + $0x8] sm:$0xf]
        %v264 = vld [vmem:[%s260 + $0xc] sm:$0xf]
        %v265 = vld [vmem:[%s260 + $0x10] sm:$0xf]
        %v266 = vld [vmem:[%s260 + $0x14] sm:$0xf]
        %v267 = vld [vmem:[%s260 + $0x18] sm:$0xf]
        %v268 = vld [vmem:[%s260 + $0x1c] sm:$0xf]
        %v269 = vld [vmem:[%s1] sm:$0xf]
        %v270 = vld [vmem:[%s1 + $0x4] sm:$0x3]
        %s271 = sadd.s32 %s255, 1
        %s272 = smul.u32 %s271, 16
        %s273 = sshra.s32 %s272, 3
        %s274 = sand.u32 %s272, 7
        %s275 = smul.addr %s273, 4
        %s276 = scalar_lea.vmem %s242, %s275
        %v277 = vld [vmem:[%s276] sm:$0xf]
        %v278 = vld [vmem:[%s276 + $0x4] sm:$0xf]
        %v279 = vld [vmem:[%s276 + $0x8] sm:$0xf]
        %v280 = vld [vmem:[%s276 + $0xc] sm:$0xf]
        %v281 = vld [vmem:[%s276 + $0x10] sm:$0xf]
        %v282 = vld [vmem:[%s276 + $0x14] sm:$0xf]
        %v283 = vld [vmem:[%s276 + $0x18] sm:$0xf]
        %v284 = vld [vmem:[%s276 + $0x1c] sm:$0xf]
        %s285 = scalar_lea.vmem %s1, 8
        %v286 = vld [vmem:[%s285] sm:$0xf]
        %v287 = vld [vmem:[%s285 + $0x4] sm:$0x3]
        %v296 = vunpack.c.l.b16 %v277
        %v297 = vunpack.c.l.b16 %v278
        %v298 = vunpack.c.l.b16 %v279
        %v299 = vunpack.c.l.b16 %v280
        %v300 = vunpack.c.l.b16 %v281
        %v301 = vunpack.c.l.b16 %v282
        %v302 = vunpack.c.l.b16 %v283
        %v303 = vunpack.c.l.b16 %v284
        %v304 = vpack.c.b16 %v297, %v296
        %v305 = vpack.c.b16 %v299, %v298
        %v306 = vpack.c.b16 %v301, %v300
        %v307 = vpack.c.b16 %v303, %v302
        %v310 = vunpack.c.l.b16 %v286
        %v311 = vunpack.c.l.b16 %v287
        %v312 = vpack.c.b16 %v311, %v310
        %vm313 = vcmask 97280
        %v315 = vsel %vm313, %v304, 0
        %v318 = vsel %vm313, %v305, 0
        %v321 = vsel %vm313, %v306, 0
        %v324 = vsel %vm313, %v307, 0
        %vm326 = vcmask 1045504
        %v328 = vsel %vm326, %v312, 0
        %330 = vmatprep.subr.bf16.mxu0 0
        %331 = vmatpush1.bf16.msra.mxu0 0
        %332 = vmatprep.subr.bf16.mxu0 0
        %333 = vmatpush1.bf16.msra.mxu0 0
        %334 = vmatprep.subr.bf16.mxu0 0
        %335 = vmatpush1.bf16.msra.mxu0 0
        %336 = vmatprep.subr.bf16.mxu0 0
        %337 = vmatpush1.bf16.msra.mxu0 0
        %338 = vmatprep.subr.bf16.mxu0 0
        %339 = vmatpush1.bf16.msra.mxu0 0
        %340 = vmatprep.subr.bf16.mxu0 0
        %341 = vmatpush1.bf16.msra.mxu0 0
        %342 = vmatprep.subr.bf16.mxu0 0
        %343 = vmatpush1.bf16.msra.mxu0 0
        %344 = vmatprep.subr.bf16.mxu0 0
        %345 = vmatpush1.bf16.msra.mxu0 %v328
        %346 = vmatprep.subr.bf16.mxu0 0
        %347 = vmatpush2.bf16.msra.mxu0 0
        %348 = vmatprep.subr.bf16.mxu0 0
        %349 = vmatpush2.bf16.msra.mxu0 0
        %350 = vmatprep.subr.bf16.mxu0 0
        %351 = vmatpush2.bf16.msra.mxu0 0
        %352 = vmatprep.subr.bf16.mxu0 0
        %353 = vmatpush2.bf16.msra.mxu0 0
        %354 = vmatprep.subr.bf16.mxu0 0
        %355 = vmatpush2.bf16.msra.mxu0 0
        %356 = vmatprep.subr.bf16.mxu0 0
        %357 = vmatpush2.bf16.msra.mxu0 0
        %358 = vmatprep.subr.bf16.mxu0 0
        %359 = vmatpush2.bf16.msra.mxu0 0
        %360 = vmatprep.subr.bf16.mxu0 0
        %361 = vmatpush2.bf16.msra.mxu0 0
        %362 = vmatprep.mubr.bf16.mxu0 0
        %363 = vmatmul.mubr.bf16.gmra.mxu0 %v315
        %v364 = vpop.f32.mrf.mxu0
        %v365 = vadd.f32 0.0, %v364
        %v366 = vpop.f32.mrf.mxu0
        %v367 = vpop.f32.mrf.mxu0
        %v368 = vadd.f32 0.0, %v367
        %v369 = vpop.f32.mrf.mxu0
        %370 = vmatprep.mubr.bf16.mxu0 0
        %371 = vmatmul.mubr.bf16.gmra.mxu0 %v318
        %v372 = vpop.f32.mrf.mxu0
        %v373 = vadd.f32 0.0, %v372
        %v374 = vpop.f32.mrf.mxu0
        %v375 = vpop.f32.mrf.mxu0
        %v376 = vadd.f32 0.0, %v375
        %v377 = vpop.f32.mrf.mxu0
        %378 = vmatprep.mubr.bf16.mxu0 0
        %379 = vmatmul.mubr.bf16.gmra.mxu0 %v321
        %v380 = vpop.f32.mrf.mxu0
        %v381 = vadd.f32 0.0, %v380
        %v382 = vpop.f32.mrf.mxu0
        %v383 = vpop.f32.mrf.mxu0
        %v384 = vadd.f32 0.0, %v383
        %v385 = vpop.f32.mrf.mxu0
        %386 = vmatprep.mubr.bf16.mxu0 0
        %387 = vmatmul.mubr.bf16.gmra.mxu0 %v324
        %v388 = vpop.f32.mrf.mxu0
        %v389 = vadd.f32 0.0, %v388
        %v390 = vpop.f32.mrf.mxu0
        %v391 = vpop.f32.mrf.mxu0
        %v392 = vadd.f32 0.0, %v391
        %v393 = vpop.f32.mrf.mxu0
        %394 = vdwg.mxu0
        %v403 = vunpack.c.l.b16 %v261
        %v404 = vunpack.c.l.b16 %v262
        %v405 = vunpack.c.l.b16 %v263
        %v406 = vunpack.c.l.b16 %v264
        %v407 = vunpack.c.l.b16 %v265
        %v408 = vunpack.c.l.b16 %v266
        %v409 = vunpack.c.l.b16 %v267
        %v410 = vunpack.c.l.b16 %v268
        %v411 = vpack.c.b16 %v404, %v403
        %v412 = vpack.c.b16 %v406, %v405
        %v413 = vpack.c.b16 %v408, %v407
        %v414 = vpack.c.b16 %v410, %v409
        %v417 = vunpack.c.l.b16 %v269
        %v418 = vunpack.c.l.b16 %v270
        %v419 = vpack.c.b16 %v418, %v417
        %v421 = vsel %vm313, %v411, 0
        %v424 = vsel %vm313, %v412, 0
        %v427 = vsel %vm313, %v413, 0
        %v430 = vsel %vm313, %v414, 0
        %v433 = vsel %vm326, %v419, 0
        %435 = vmatprep.subr.bf16.mxu0 0
        %436 = vmatpush1.bf16.msra.mxu0 0
        %437 = vmatprep.subr.bf16.mxu0 0
        %438 = vmatpush1.bf16.msra.mxu0 0
        %439 = vmatprep.subr.bf16.mxu0 0
        %440 = vmatpush1.bf16.msra.mxu0 0
        %441 = vmatprep.subr.bf16.mxu0 0
        %442 = vmatpush1.bf16.msra.mxu0 0
        %443 = vmatprep.subr.bf16.mxu0 0
        %444 = vmatpush1.bf16.msra.mxu0 0
        %445 = vmatprep.subr.bf16.mxu0 0
        %446 = vmatpush1.bf16.msra.mxu0 0
        %447 = vmatprep.subr.bf16.mxu0 0
        %448 = vmatpush1.bf16.msra.mxu0 0
        %449 = vmatprep.subr.bf16.mxu0 0
        %450 = vmatpush1.bf16.msra.mxu0 %v433
        %451 = vmatprep.subr.bf16.mxu0 0
        %452 = vmatpush2.bf16.msra.mxu0 0
        %453 = vmatprep.subr.bf16.mxu0 0
        %454 = vmatpush2.bf16.msra.mxu0 0
        %455 = vmatprep.subr.bf16.mxu0 0
        %456 = vmatpush2.bf16.msra.mxu0 0
        %457 = vmatprep.subr.bf16.mxu0 0
        %458 = vmatpush2.bf16.msra.mxu0 0
        %459 = vmatprep.subr.bf16.mxu0 0
        %460 = vmatpush2.bf16.msra.mxu0 0
        %461 = vmatprep.subr.bf16.mxu0 0
        %462 = vmatpush2.bf16.msra.mxu0 0
        %463 = vmatprep.subr.bf16.mxu0 0
        %464 = vmatpush2.bf16.msra.mxu0 0
        %465 = vmatprep.subr.bf16.mxu0 0
        %466 = vmatpush2.bf16.msra.mxu0 0
        %467 = vmatprep.mubr.bf16.mxu0 0
        %468 = vmatmul.mubr.bf16.gmra.mxu0 %v421
        %v469 = vpop.f32.mrf.mxu0
        %v470 = vadd.f32 %v365, %v469
        %v471 = vpop.f32.mrf.mxu0
        %v472 = vpop.f32.mrf.mxu0
        %v473 = vadd.f32 %v368, %v472
        %v474 = vpop.f32.mrf.mxu0
        %475 = vmatprep.mubr.bf16.mxu0 0
        %476 = vmatmul.mubr.bf16.gmra.mxu0 %v424
        %v477 = vpop.f32.mrf.mxu0
        %v478 = vadd.f32 %v373, %v477
        %v479 = vpop.f32.mrf.mxu0
        %v480 = vpop.f32.mrf.mxu0
        %v481 = vadd.f32 %v376, %v480
        %v482 = vpop.f32.mrf.mxu0
        %483 = vmatprep.mubr.bf16.mxu0 0
        %484 = vmatmul.mubr.bf16.gmra.mxu0 %v427
        %v485 = vpop.f32.mrf.mxu0
        %v486 = vadd.f32 %v381, %v485
        %v487 = vpop.f32.mrf.mxu0
        %v488 = vpop.f32.mrf.mxu0
        %v489 = vadd.f32 %v384, %v488
        %v490 = vpop.f32.mrf.mxu0
        %491 = vmatprep.mubr.bf16.mxu0 0
        %492 = vmatmul.mubr.bf16.gmra.mxu0 %v430
        %v493 = vpop.f32.mrf.mxu0
        %v494 = vadd.f32 %v389, %v493
        %v495 = vpop.f32.mrf.mxu0
        %v496 = vpop.f32.mrf.mxu0
        %v497 = vadd.f32 %v392, %v496
        %v498 = vpop.f32.mrf.mxu0
        %499 = vdwg.mxu0
        %s500 = sadd.s32 %s255, 2
        %s501 = smul.u32 %s500, 16
        %s502 = sshra.s32 %s501, 3
        %s503 = sand.u32 %s501, 7
        %s504 = smul.addr %s502, 4
        %s505 = scalar_lea.vmem %s242, %s504
        %v506 = vld [vmem:[%s505] sm:$0xf]
        %v507 = vld [vmem:[%s505 + $0x4] sm:$0xf]
        %v508 = vld [vmem:[%s505 + $0x8] sm:$0xf]
        %v509 = vld [vmem:[%s505 + $0xc] sm:$0xf]
        %v510 = vld [vmem:[%s505 + $0x10] sm:$0xf]
        %v511 = vld [vmem:[%s505 + $0x14] sm:$0xf]
        %v512 = vld [vmem:[%s505 + $0x18] sm:$0xf]
        %v513 = vld [vmem:[%s505 + $0x1c] sm:$0xf]
        %s514 = scalar_lea.vmem %s1, 16
        %v515 = vld [vmem:[%s514] sm:$0xf]
        %v516 = vld [vmem:[%s514 + $0x4] sm:$0x3]
        %v525 = vunpack.c.l.b16 %v506
        %v526 = vunpack.c.l.b16 %v507
        %v527 = vunpack.c.l.b16 %v508
        %v528 = vunpack.c.l.b16 %v509
        %v529 = vunpack.c.l.b16 %v510
        %v530 = vunpack.c.l.b16 %v511
        %v531 = vunpack.c.l.b16 %v512
        %v532 = vunpack.c.l.b16 %v513
        %v533 = vpack.c.b16 %v526, %v525
        %v534 = vpack.c.b16 %v528, %v527
        %v535 = vpack.c.b16 %v530, %v529
        %v536 = vpack.c.b16 %v532, %v531
        %v539 = vunpack.c.l.b16 %v515
        %v540 = vunpack.c.l.b16 %v516
        %v541 = vpack.c.b16 %v540, %v539
        %v543 = vsel %vm313, %v533, 0
        %v546 = vsel %vm313, %v534, 0
        %v549 = vsel %vm313, %v535, 0
        %v552 = vsel %vm313, %v536, 0
        %v555 = vsel %vm326, %v541, 0
        %557 = vmatprep.subr.bf16.mxu0 0
        %558 = vmatpush1.bf16.msra.mxu0 0
        %559 = vmatprep.subr.bf16.mxu0 0
        %560 = vmatpush1.bf16.msra.mxu0 0
        %561 = vmatprep.subr.bf16.mxu0 0
        %562 = vmatpush1.bf16.msra.mxu0 0
        %563 = vmatprep.subr.bf16.mxu0 0
        %564 = vmatpush1.bf16.msra.mxu0 0
        %565 = vmatprep.subr.bf16.mxu0 0
        %566 = vmatpush1.bf16.msra.mxu0 0
        %567 = vmatprep.subr.bf16.mxu0 0
        %568 = vmatpush1.bf16.msra.mxu0 0
        %569 = vmatprep.subr.bf16.mxu0 0
        %570 = vmatpush1.bf16.msra.mxu0 0
        %571 = vmatprep.subr.bf16.mxu0 0
        %572 = vmatpush1.bf16.msra.mxu0 %v555
        %573 = vmatprep.subr.bf16.mxu0 0
        %574 = vmatpush2.bf16.msra.mxu0 0
        %575 = vmatprep.subr.bf16.mxu0 0
        %576 = vmatpush2.bf16.msra.mxu0 0
        %577 = vmatprep.subr.bf16.mxu0 0
        %578 = vmatpush2.bf16.msra.mxu0 0
        %579 = vmatprep.subr.bf16.mxu0 0
        %580 = vmatpush2.bf16.msra.mxu0 0
        %581 = vmatprep.subr.bf16.mxu0 0
        %582 = vmatpush2.bf16.msra.mxu0 0
        %583 = vmatprep.subr.bf16.mxu0 0
        %584 = vmatpush2.bf16.msra.mxu0 0
        %585 = vmatprep.subr.bf16.mxu0 0
        %586 = vmatpush2.bf16.msra.mxu0 0
        %587 = vmatprep.subr.bf16.mxu0 0
        %588 = vmatpush2.bf16.msra.mxu0 0
        %589 = vmatprep.mubr.bf16.mxu0 0
        %590 = vmatmul.mubr.bf16.gmra.mxu0 %v543
        %v591 = vpop.f32.mrf.mxu0
        %v592 = vadd.f32 0.0, %v591
        %v593 = vpop.f32.mrf.mxu0
        %v594 = vpop.f32.mrf.mxu0
        %v595 = vadd.f32 0.0, %v594
        %v596 = vpop.f32.mrf.mxu0
        %597 = vmatprep.mubr.bf16.mxu0 0
        %598 = vmatmul.mubr.bf16.gmra.mxu0 %v546
        %v599 = vpop.f32.mrf.mxu0
        %v600 = vadd.f32 0.0, %v599
        %v601 = vpop.f32.mrf.mxu0
        %v602 = vpop.f32.mrf.mxu0
        %v603 = vadd.f32 0.0, %v602
        %v604 = vpop.f32.mrf.mxu0
        %605 = vmatprep.mubr.bf16.mxu0 0
        %606 = vmatmul.mubr.bf16.gmra.mxu0 %v549
        %v607 = vpop.f32.mrf.mxu0
        %v608 = vadd.f32 0.0, %v607
        %v609 = vpop.f32.mrf.mxu0
        %v610 = vpop.f32.mrf.mxu0
        %v611 = vadd.f32 0.0, %v610
        %v612 = vpop.f32.mrf.mxu0
        %613 = vmatprep.mubr.bf16.mxu0 0
        %614 = vmatmul.mubr.bf16.gmra.mxu0 %v552
        %v615 = vpop.f32.mrf.mxu0
        %v616 = vadd.f32 0.0, %v615
        %v617 = vpop.f32.mrf.mxu0
        %v618 = vpop.f32.mrf.mxu0
        %v619 = vadd.f32 0.0, %v618
        %v620 = vpop.f32.mrf.mxu0
        %621 = vdwg.mxu0
        %v622 = vadd.f32 %v470, %v592
        %v623 = vadd.f32 %v473, %v595
        %v624 = vadd.f32 %v478, %v600
        %v625 = vadd.f32 %v481, %v603
        %v626 = vadd.f32 %v486, %v608
        %v627 = vadd.f32 %v489, %v611
        %v628 = vadd.f32 %v494, %v616
        %v629 = vadd.f32 %v497, %v619
        %v630 = vpack.c.bf16 %v623, %v622
        %v631 = vpack.c.bf16 %v625, %v624
        %v632 = vpack.c.bf16 %v627, %v626
        %v633 = vpack.c.bf16 %v629, %v628
        %v638 = vunpack.c.l.b16 %v630
        %v639 = vunpack.c.h.b16 %v630
        %v640 = vunpack.c.l.b16 %v631
        %v641 = vunpack.c.h.b16 %v631
        %v642 = vunpack.c.l.b16 %v632
        %v643 = vunpack.c.h.b16 %v632
        %v644 = vunpack.c.l.b16 %v633
        %v645 = vunpack.c.h.b16 %v633
        %v646 = vpack.c.b16 %v638, %v638
        %v647 = vpack.c.b16 %v639, %v639
        %v648 = vpack.c.b16 %v640, %v640
        %v649 = vpack.c.b16 %v641, %v641
        %v650 = vpack.c.b16 %v642, %v642
        %v651 = vpack.c.b16 %v643, %v643
        %v652 = vpack.c.b16 %v644, %v644
        %v653 = vpack.c.b16 %v645, %v645
        %662 = vst [vmem:[%s223] sm:$0xf] %v646
        %663 = vst [vmem:[%s223 + $0x4] sm:$0xf] %v647
        %664 = vst [vmem:[%s223 + $0x8] sm:$0xf] %v648
        %665 = vst [vmem:[%s223 + $0xc] sm:$0xf] %v649
        %666 = vst [vmem:[%s223 + $0x10] sm:$0xf] %v650
        %667 = vst [vmem:[%s223 + $0x14] sm:$0xf] %v651
        %668 = vst [vmem:[%s223 + $0x18] sm:$0xf] %v652
        %669 = vst [vmem:[%s223 + $0x1c] sm:$0xf] %v653
        %v670 = vld [vmem:[%s230] sm:$0xff]
        %v671 = vadd.f32 %v622, %v623
        %v672 = vadd.f32 %v671, %v624
        %v673 = vadd.f32 %v672, %v625
        %v674 = vadd.f32 %v673, %v626
        %v675 = vadd.f32 %v674, %v627
        %v676 = vadd.f32 %v675, %v628
        %v677 = vadd.f32 %v676, %v629
        %v678 = vadd.f32 %v670, %v677
        %679 = vst [vmem:[%s230] sm:$0xff] %v678
        %v680 = vld [vmem:[%s237] sm:$0xff]
        %v681 = vmul.f32 %v622, %v622
        %v682 = vmul.f32 %v623, %v623
        %v683 = vmul.f32 %v624, %v624
        %v684 = vmul.f32 %v625, %v625
        %v685 = vmul.f32 %v626, %v626
        %v686 = vmul.f32 %v627, %v627
        %v687 = vmul.f32 %v628, %v628
        %v688 = vmul.f32 %v629, %v629
        %v689 = vadd.f32 %v681, %v682
        %v690 = vadd.f32 %v689, %v683
        %v691 = vadd.f32 %v690, %v684
        %v692 = vadd.f32 %v691, %v685
        %v693 = vadd.f32 %v692, %v686
        %v694 = vadd.f32 %v693, %v687
        %v695 = vadd.f32 %v694, %v688
        %v696 = vadd.f32 %v680, %v695
        %697 = vst [vmem:[%s237] sm:$0xff] %v696
        %s698 = sand.u32 %s102, 1
        %s699 = scalar_lea.sflag [#allocation3], %s698
        %s700 = sand.u32 %s102, 1
        %s701 = smul.addr %s700, 32
        %s702 = scalar_lea.vmem [#allocation2], %s701
        %s703 = sand.u32 %s22, 1
        %s704 = scalar_lea.sflag [#allocation5], %s703
        %s705 = sand.u32 %s130, 1
        %s706 = smul.addr %s705, 8
        %s707 = scalar_lea.vmem [#allocation4], %s706
        %s708 = sand.u32 %s22, 1
        %s709 = scalar_lea.sflag [#allocation5], %s708
        %s710 = sand.u32 %s158, 1
        %s711 = smul.addr %s710, 8
        %s712 = scalar_lea.vmem [#allocation6], %s711
        // Predicated region
        $region33: #{tpu_custom_call.1} parent=27 // pred_check
          %p713 = pneg %p112
        $region34: #{tpu_custom_call.1} parent=27 // pred_check_branch
          %715 = sbr.rel (%p713) target = $region36
        $region35: #{tpu_custom_call.1} parent=27 // pred_region
          %s716 = smul.u32 %s28, 2
          %s717 = sadd.s32 %s716, %s29
          %s718 = smul.u32 8, %s717
          %s720 = ssub.s32 512, 512
          %721 = vsyncadd %s699, %s720
          %s722 = smul.addr %s27, 32
          %s723 = sadd.s32 %s718, %s722
          %s724 = smul.addr %s723, 64
          %s725 = scalar_lea.hbm %s2, %s724
          %s726 = sshll.u32 %s702, 4
          %s727 = int_to_ptr.vmem [resolvable:$true] %s726
          %732 = dma.vmem_to_hbm [thread:$0]  %s727, 512, %s725, %s699, 64, 64, 4
        $region36: #{tpu_custom_call.1} parent=27 // pred_fallthru
          _
        // Predicated region
        $region37: #{tpu_custom_call.1} parent=27 // pred_check
          %p733 = pneg %p140
        $region38: #{tpu_custom_call.1} parent=27 // pred_check_branch
          %735 = sbr.rel (%p733) target = $region40
        $region39: #{tpu_custom_call.1} parent=27 // pred_region
          %s737 = ssub.s32 128, 128
          %738 = vsyncadd %s704, %s737
          %s739 = smul.addr %s27, 2
          %s740 = sadd.s32 %s28, %s739
          %s741 = smul.addr %s740, 128
          %s742 = scalar_lea.hbm %s3, %s741
          %s744 = sshll.u32 %s707, 4
          %s745 = int_to_ptr.vmem [resolvable:$true] %s744
          %747 = dma.vmem_to_hbm [thread:$0]  %s745, 128, %s742, %s704
        $region40: #{tpu_custom_call.1} parent=27 // pred_fallthru
          _
        // Predicated region
        $region41: #{tpu_custom_call.1} parent=27 // pred_check
          %p748 = pneg %p168
        $region42: #{tpu_custom_call.1} parent=27 // pred_check_branch
          %750 = sbr.rel (%p748) target = $region44
        $region43: #{tpu_custom_call.1} parent=27 // pred_region
          %s752 = ssub.s32 128, 128
          %753 = vsyncadd %s709, %s752
          %s754 = smul.addr %s27, 2
          %s755 = sadd.s32 %s28, %s754
          %s756 = smul.addr %s755, 128
          %s757 = scalar_lea.hbm %s4, %s756
          %s759 = sshll.u32 %s712, 4
          %s760 = int_to_ptr.vmem [resolvable:$true] %s759
          %762 = dma.vmem_to_hbm [thread:$0]  %s760, 128, %s757, %s709
        $region44: #{tpu_custom_call.1} parent=27 // pred_fallthru
          _
      $region28: #{tpu_custom_call.1} parent=5 // pred_fallthru
        _
      %p763 = scmp.le.s32.totalorder 2, %s17
      // Predicated region
      $region45: #{tpu_custom_call.1} parent=5 // pred_check
        %p764 = pneg %p763
      $region46: #{tpu_custom_call.1} parent=5 // pred_check_branch
        %766 = sbr.rel (%p764) target = $region48
      $region47: #{tpu_custom_call.1} parent=5 // pred_region
        %s767 = ssub.s32 %s17, 2
        // Predicated region
        $region49: #{tpu_custom_call.1} parent=47 // pred_check
          %p768 = pneg %p118
        $region50: #{tpu_custom_call.1} parent=47 // pred_check_branch
          %770 = sbr.rel (%p768) target = $region52
        $region51: #{tpu_custom_call.1} parent=47 // pred_region
          %s771 = sand.u32 %s103, 1
          %s772 = scalar_lea.sflag [#allocation3], %s771
          %s773 = sand.u32 %s103, 1
          %s774 = smul.addr %s773, 32
          %s775 = scalar_lea.vmem [#allocation2], %s774
          %776 = dma.done %s772, 512
        $region52: #{tpu_custom_call.1} parent=47 // pred_fallthru
          _
        // Predicated region
        $region53: #{tpu_custom_call.1} parent=47 // pred_check
          %p777 = pneg %p146
        $region54: #{tpu_custom_call.1} parent=47 // pred_check_branch
          %779 = sbr.rel (%p777) target = $region56
        $region55: #{tpu_custom_call.1} parent=47 // pred_region
          %s780 = sand.u32 %s23, 1
          %s781 = scalar_lea.sflag [#allocation5], %s780
          %s782 = sand.u32 %s131, 1
          %s783 = smul.addr %s782, 8
          %s784 = scalar_lea.vmem [#allocation4], %s783
          %785 = dma.done %s781, 128
        $region56: #{tpu_custom_call.1} parent=47 // pred_fallthru
          _
        // Predicated region
        $region57: #{tpu_custom_call.1} parent=47 // pred_check
          %p786 = pneg %p174
        $region58: #{tpu_custom_call.1} parent=47 // pred_check_branch
          %788 = sbr.rel (%p786) target = $region60
        $region59: #{tpu_custom_call.1} parent=47 // pred_region
          %s789 = sand.u32 %s23, 1
          %s790 = scalar_lea.sflag [#allocation5], %s789
          %s791 = sand.u32 %s159, 1
          %s792 = smul.addr %s791, 8
          %s793 = scalar_lea.vmem [#allocation6], %s792
          %794 = dma.done %s790, 128
        $region60: #{tpu_custom_call.1} parent=47 // pred_fallthru
          _
      $region48: #{tpu_custom_call.1} parent=5 // pred_fallthru
        _
    $region6: #{tpu_custom_call.1} parent=1 // loop_footer
      %s21 = sadd.s32 1, %s17
    $region7: #{tpu_custom_call.1} parent=1 // loop_footer_branch
      %16 = sbr.rel target = $region3
    $region8: #{tpu_custom_call.1} parent=1 // loop_exit
      _
    %795 = vsyncpa [#allocation3], 1
    %s796 = scalar_lea.sflag [#allocation3], 1
    %797 = vsyncpa %s796, 1
    %798 = vsyncpa [#allocation5], 1
    %s799 = scalar_lea.sflag [#allocation5], 1
    %800 = vsyncpa %s799, 1

// kernel: tpu_custom_call.1
$region0: #{tpu_custom_call.1}
  #allocation0 [shape = 'u32[]', space=smem, size = 0x4, offset = 0x4, fixed_abs, tag = 'smem constant byte address 0x4 - core index']
  #allocation1 [shape = 'u32[144,128]{1,0:T(1,128)}', space=vmem, size = 0x12000, scoped, tag = 'internal scratch']
  %s0 = inlined_call_operand.vmem [shape: bf16[2,288,12], index: 0, kind: input, shape index: {}]
  %s1 = inlined_call_operand.vmem [shape: bf16[3,12,128], index: 1, kind: input, shape index: {}]
  %s2 = inlined_call_operand.hbm [shape: bf16[2,256,128], index: 2, kind: output, shape index: {0}]
  %s3 = inlined_call_operand.hbm [shape: f32[2,2,8,128], index: 3, kind: output, shape index: {1}]
  %s4 = inlined_call_operand.hbm [shape: f32[2,2,8,128], index: 4, kind: output, shape index: {2}]
  %5 = xla_tuple %s2, %s3, %s4
  %s6 = sld [smem:[#allocation0]]
  $region61: #{tpu_custom_call.1} parent=0
    _
  %s8 = ssub.s32 1, %s6
  %s9 = scalar_select 0, %s8, %s6
  $region1: #{tpu_custom_call.1} parent=0
    #allocation2 [shape = 'u8[32768]{0}', space=vmem, size = 0x8000, scoped, tag = 'output window, operand 0']
    #allocation3 [shape = 's32[2]{0}', space=sflag, size = 0x8, scoped, tag = 'scoped memory for tpu_custom_call.1']
    #allocation4 [shape = 'u8[8192]{0}', space=vmem, size = 0x2000, scoped, tag = 'output window, operand 1']
    #allocation5 [shape = 's32[2]{0}', space=sflag, size = 0x8, scoped, tag = 'scoped memory for tpu_custom_call.1']
    #allocation6 [shape = 'u8[8192]{0}', space=vmem, size = 0x2000, scoped, tag = 'output window, operand 2']
    %10 = vsyncpa [#allocation3], 0
    %s11 = scalar_lea.sflag [#allocation3], 1
    %12 = vsyncpa %s11, 0
    %13 = vsyncpa [#allocation5], 0
    %s14 = scalar_lea.sflag [#allocation5], 1
    %15 = vsyncpa %s14, 0
    loop: start=0, step=1, limit=10
    $region2: #{tpu_custom_call.1} parent=1 // loop_pre_header
      _
    $region3: #{tpu_custom_call.1} parent=1 // loop_header
      %s17 = sphi 0, %s21
      %p18 = scmp.ge.s32.totalorder %s17, 10
      %s24 = sphi 0, %s43
      %s25 = sphi 0, %s39
      %s26 = sphi 0, %s35
      %s27 = sphi 0, %s24
      %s28 = sphi 0, %s25
      %s29 = sphi 0, %s26
      %s30 = sphi 0, %s27
      %s31 = sphi 0, %s28
      %s32 = sphi 0, %s29
      %s46 = sphi 0, %s48
      %s49 = sphi 0, %s46
      %s50 = sphi 0, %s49
      %s66 = sphi 0, %s50
      %s70 = sphi 0, %s70
      %s72 = sphi 0, %s70
      %s73 = sphi 0, %s72
      %s87 = sphi 0, %s73
      %s99 = sphi 0, %s101
      %s102 = sphi 0, %s99
      %s103 = sphi 0, %s102
      %s119 = sphi 0, %s103
      %s127 = sphi 0, %s129
      %s130 = sphi 0, %s127
      %s131 = sphi 0, %s130
      %s147 = sphi 0, %s131
      %s155 = sphi 0, %s157
      %s158 = sphi 0, %s155
      %s159 = sphi 0, %s158
      %s175 = sphi 0, %s159
    $region4: #{tpu_custom_call.1} parent=1 // loop_header_branch
      %20 = sbr.rel (%p18) target = $region8
    $region5: #{tpu_custom_call.1} parent=1 // loop_body
      %s22 = ssub.s32 %s17, 1
      %s23 = ssub.s32 %s17, 2
      %s33 = sadd.s32 1, %s26
      %p34 = scmp.ge.s32.totalorder %s33, 2
      %s35 = scalar_select %p34, 0, %s33
      %s36 = sadd.s32 1, %s25
      %s37 = scalar_select %p34, %s36, %s25
      %p38 = scmp.ge.s32.totalorder %s37, 2
      %s39 = scalar_select %p38, 0, %s37
      %s40 = sadd.s32 1, %s24
      %s41 = scalar_select %p38, %s40, %s24
      %p42 = scmp.ge.s32.totalorder %s41, 2
      %s43 = scalar_select %p42, 0, %s41
      %s44 = ssub.s32 %s24, %s43
      %p45 = scmp.eq.s32.totalorder %s44, 0
      %s47 = sadd.s32 %s46, 1
      %s48 = scalar_select %p45, %s46, %s47
      %p51 = pneg %p45
      %p52 = scmp.eq.s32.totalorder %s17, 7
      %p53 = por %p51, %p52
      %p54 = scmp.ne.s32.totalorder %s46, %s49
      %p55 = scmp.eq.s32.totalorder %s17, 0
      %p56 = por %p54, %p55
      %p57 = scmp.ne.s32.totalorder %s46, %s49
      %p58 = scmp.eq.s32.totalorder %s22, 7
      %p59 = por %p57, %p58
      %p60 = scmp.ne.s32.totalorder %s49, %s50
      %p61 = scmp.eq.s32.totalorder %s22, 0
      %p62 = por %p60, %p61
      %p63 = scmp.ne.s32.totalorder %s49, %s50
      %p64 = scmp.eq.s32.totalorder %s23, 7
      %p65 = por %p63, %p64
      %p67 = scmp.ne.s32.totalorder %s50, %s66
      %p68 = scmp.eq.s32.totalorder %s23, 0
      %p69 = por %p67, %p68
      %s71 = sadd.s32 %s70, 1
      %p74 = scmp.eq.s32.totalorder %s17, 7
      %p75 = scmp.ne.s32.totalorder %s70, %s72
      %p76 = scmp.eq.s32.totalorder %s17, 0
      %p77 = por %p75, %p76
      %p78 = scmp.ne.s32.totalorder %s70, %s72
      %p79 = scmp.eq.s32.totalorder %s22, 7
      %p80 = por %p78, %p79
      %p81 = scmp.ne.s32.totalorder %s72, %s73
      %p82 = scmp.eq.s32.totalorder %s22, 0
      %p83 = por %p81, %p82
      %p84 = scmp.ne.s32.totalorder %s72, %s73
      %p85 = scmp.eq.s32.totalorder %s23, 7
      %p86 = por %p84, %p85
      %p88 = scmp.ne.s32.totalorder %s73, %s87
      %p89 = scmp.eq.s32.totalorder %s23, 0
      %p90 = por %p88, %p89
      %s91 = smul.u32 %s25, 2
      %s92 = sadd.s32 %s91, %s26
      %s93 = smul.u32 %s39, 2
      %s94 = sadd.s32 %s93, %s35
      %s95 = ssub.s32 %s24, %s43
      %s96 = ssub.s32 %s92, %s94
      %s97 = sor.u32 %s95, %s96
      %p98 = scmp.eq.s32.totalorder %s97, 0
      %s100 = sadd.s32 %s99, 1
      %s101 = scalar_select %p98, %s99, %s100
      %p104 = pneg %p98
      %p105 = scmp.eq.s32.totalorder %s17, 7
      %p106 = por %p104, %p105
      %p107 = scmp.ne.s32.totalorder %s99, %s102
      %p108 = scmp.eq.s32.totalorder %s17, 0
      %p109 = por %p107, %p108
      %p110 = scmp.ne.s32.totalorder %s99, %s102
      %p111 = scmp.eq.s32.totalorder %s22, 7
      %p112 = por %p110, %p111
      %p113 = scmp.ne.s32.totalorder %s102, %s103
      %p114 = scmp.eq.s32.totalorder %s22, 0
      %p115 = por %p113, %p114
      %p116 = scmp.ne.s32.totalorder %s102, %s103
      %p117 = scmp.eq.s32.totalorder %s23, 7
      %p118 = por %p116, %p117
      %p120 = scmp.ne.s32.totalorder %s103, %s119
      %p121 = scmp.eq.s32.totalorder %s23, 0
      %p122 = por %p120, %p121
      %s123 = ssub.s32 %s24, %s43
      %s124 = ssub.s32 %s25, %s39
      %s125 = sor.u32 %s123, %s124
      %p126 = scmp.eq.s32.totalorder %s125, 0
      %s128 = sadd.s32 %s127, 1
      %s129 = scalar_select %p126, %s127, %s128
      %p132 = pneg %p126
      %p133 = scmp.eq.s32.totalorder %s17, 7
      %p134 = por %p132, %p133
      %p135 = scmp.ne.s32.totalorder %s127, %s130
      %p136 = scmp.eq.s32.totalorder %s17, 0
      %p137 = por %p135, %p136
      %p138 = scmp.ne.s32.totalorder %s127, %s130
      %p139 = scmp.eq.s32.totalorder %s22, 7
      %p140 = por %p138, %p139
      %p141 = scmp.ne.s32.totalorder %s130, %s131
      %p142 = scmp.eq.s32.totalorder %s22, 0
      %p143 = por %p141, %p142
      %p144 = scmp.ne.s32.totalorder %s130, %s131
      %p145 = scmp.eq.s32.totalorder %s23, 7
      %p146 = por %p144, %p145
      %p148 = scmp.ne.s32.totalorder %s131, %s147
      %p149 = scmp.eq.s32.totalorder %s23, 0
      %p150 = por %p148, %p149
      %s151 = ssub.s32 %s24, %s43
      %s152 = ssub.s32 %s25, %s39
      %s153 = sor.u32 %s151, %s152
      %p154 = scmp.eq.s32.totalorder %s153, 0
      %s156 = sadd.s32 %s155, 1
      %s157 = scalar_select %p154, %s155, %s156
      %p160 = pneg %p154
      %p161 = scmp.eq.s32.totalorder %s17, 7
      %p162 = por %p160, %p161
      %p163 = scmp.ne.s32.totalorder %s155, %s158
      %p164 = scmp.eq.s32.totalorder %s17, 0
      %p165 = por %p163, %p164
      %p166 = scmp.ne.s32.totalorder %s155, %s158
      %p167 = scmp.eq.s32.totalorder %s22, 7
      %p168 = por %p166, %p167
      %p169 = scmp.ne.s32.totalorder %s158, %s159
      %p170 = scmp.eq.s32.totalorder %s22, 0
      %p171 = por %p169, %p170
      %p172 = scmp.ne.s32.totalorder %s158, %s159
      %p173 = scmp.eq.s32.totalorder %s23, 7
      %p174 = por %p172, %p173
      %p176 = scmp.ne.s32.totalorder %s159, %s175
      %p177 = scmp.eq.s32.totalorder %s23, 0
      %p178 = por %p176, %p177
      %p179 = scmp.le.s32.totalorder 1, %s17
      %p180 = scmp.lt.s32.totalorder %s17, 9
      %p181 = pnand %p179, %p180
      %p182 = pneg %p181
      // Predicated region
      $region9: #{tpu_custom_call.1} parent=5 // pred_check
        _
      $region10: #{tpu_custom_call.1} parent=5 // pred_check_branch
        %184 = sbr.rel (%p181) target = $region12
      $region11: #{tpu_custom_call.1} parent=5 // pred_region
        %s185 = ssub.s32 %s17, 1
        // Predicated region
        $region13: #{tpu_custom_call.1} parent=11 // pred_check
          %p186 = pneg %p83
        $region14: #{tpu_custom_call.1} parent=11 // pred_check_branch
          %188 = sbr.rel (%p186) target = $region16
        $region15: #{tpu_custom_call.1} parent=11 // pred_region
          _
        $region16: #{tpu_custom_call.1} parent=11 // pred_fallthru
          _
      $region12: #{tpu_custom_call.1} parent=5 // pred_fallthru
        _
      %p189 = scmp.lt.s32.totalorder %s17, 8
      // Predicated region
      $region17: #{tpu_custom_call.1} parent=5 // pred_check
        %p190 = pneg %p189
      $region18: #{tpu_custom_call.1} parent=5 // pred_check_branch
        %192 = sbr.rel (%p190) target = $region20
      $region19: #{tpu_custom_call.1} parent=5 // pred_region
        // Predicated region
        $region21: #{tpu_custom_call.1} parent=19 // pred_check
          %p193 = pneg %p56
        $region22: #{tpu_custom_call.1} parent=19 // pred_check_branch
          %195 = sbr.rel (%p193) target = $region24
        $region23: #{tpu_custom_call.1} parent=19 // pred_region
          %p196 = scmp.lt.s32.totalorder %s24, 1
          %s197 = scalar_select %p196, %s24, 1
          %s198 = smul.addr %s197, 36
          %s199 = smul.addr %s198, 4
          %s200 = scalar_lea.vmem %s0, %s199
        $region24: #{tpu_custom_call.1} parent=19 // pred_fallthru
          _
      $region20: #{tpu_custom_call.1} parent=5 // pred_fallthru
        _
      %p201 = scmp.le.s32.totalorder 1, %s17
      %p202 = scmp.lt.s32.totalorder %s17, 9
      %p203 = pnand %p201, %p202
      %p204 = pneg %p203
      // Predicated region
      $region25: #{tpu_custom_call.1} parent=5 // pred_check
        _
      $region26: #{tpu_custom_call.1} parent=5 // pred_check_branch
        %206 = sbr.rel (%p203) target = $region28
      $region27: #{tpu_custom_call.1} parent=5 // pred_region
        %s207 = ssub.s32 %s17, 1
        %p208 = scmp.lt.s32.totalorder %s27, 1
        %s209 = scalar_select %p208, %s27, 1
        %s210 = smul.addr %s209, 36
        %s211 = smul.addr %s210, 4
        %s212 = scalar_lea.vmem %s0, %s211
        %p213 = pneg %p62
        %p214 = pneg %p59
        %p215 = pneg %p83
        %p216 = pneg %p80
        %p217 = pneg %p115
        %p218 = pneg %p112
        %s219 = sand.u32 %s102, 1
        %s220 = scalar_lea.sflag [#allocation3], %s219
        %s221 = sand.u32 %s102, 1
        %s222 = smul.addr %s221, 32
        %s223 = scalar_lea.vmem [#allocation2], %s222
        %p224 = pneg %p143
        %p225 = pneg %p140
        %s226 = sand.u32 %s22, 1
        %s227 = scalar_lea.sflag [#allocation5], %s226
        %s228 = sand.u32 %s130, 1
        %s229 = smul.addr %s228, 8
        %s230 = scalar_lea.vmem [#allocation4], %s229
        %p231 = pneg %p171
        %p232 = pneg %p168
        %s233 = sand.u32 %s22, 1
        %s234 = scalar_lea.sflag [#allocation5], %s233
        %s235 = sand.u32 %s158, 1
        %s236 = smul.addr %s235, 8
        %s237 = scalar_lea.vmem [#allocation6], %s236
        %p238 = scmp.lt.s32.totalorder %s27, 1
        %s239 = scalar_select %p238, %s27, 1
        %s240 = smul.addr %s239, 36
        %s241 = smul.addr %s240, 4
        %s242 = scalar_lea.vmem %s0, %s241
        %s243 = smul.u32 %s28, 2
        %s244 = sadd.s32 %s243, %s29
        %s245 = smul.u32 8, %s244
        %p247 = scmp.eq.s32.totalorder %s29, 0
        // Predicated region
        $region29: #{tpu_custom_call.1} parent=27 // pred_check
          %p248 = pneg %p247
        $region30: #{tpu_custom_call.1} parent=27 // pred_check_branch
          %250 = sbr.rel (%p248) target = $region32
        $region31: #{tpu_custom_call.1} parent=27 // pred_region
          %251 = vst [vmem:[%s230] sm:$0xff] 0.0
          %252 = vst [vmem:[%s237] sm:$0xff] 0.0
        $region32: #{tpu_custom_call.1} parent=27 // pred_fallthru
          _
        %s253 = smul.u32 %s28, 2
        %s254 = sadd.s32 %s253, %s29
        %s255 = smul.u32 %s254, 4
        %s256 = smul.u32 %s254, 64
        %s257 = sshra.s32 %s256, 3
        %s258 = sand.u32 %s256, 7
        %s259 = smul.addr %s257, 4
        %s260 = scalar_lea.vmem %s242, %s259
        %v261 = vld [vmem:[%s260] sm:$0xf]
        %v262 = vld [vmem:[%s260 + $0x4] sm:$0xf]
        %v263 = vld [vmem:[%s260 + $0x8] sm:$0xf]
        %v264 = vld [vmem:[%s260 + $0xc] sm:$0xf]
        %v265 = vld [vmem:[%s260 + $0x10] sm:$0xf]
        %v266 = vld [vmem:[%s260 + $0x14] sm:$0xf]
        %v267 = vld [vmem:[%s260 + $0x18] sm:$0xf]
        %v268 = vld [vmem:[%s260 + $0x1c] sm:$0xf]
        %v269 = vld [vmem:[%s1] sm:$0xf]
        %v270 = vld [vmem:[%s1 + $0x4] sm:$0x3]
        %s271 = sadd.s32 %s255, 1
        %s272 = smul.u32 %s271, 16
        %s273 = sshra.s32 %s272, 3
        %s274 = sand.u32 %s272, 7
        %s275 = smul.addr %s273, 4
        %s276 = scalar_lea.vmem %s242, %s275
        %v277 = vld [vmem:[%s276] sm:$0xf]
        %v278 = vld [vmem:[%s276 + $0x4] sm:$0xf]
        %v279 = vld [vmem:[%s276 + $0x8] sm:$0xf]
        %v280 = vld [vmem:[%s276 + $0xc] sm:$0xf]
        %v281 = vld [vmem:[%s276 + $0x10] sm:$0xf]
        %v282 = vld [vmem:[%s276 + $0x14] sm:$0xf]
        %v283 = vld [vmem:[%s276 + $0x18] sm:$0xf]
        %v284 = vld [vmem:[%s276 + $0x1c] sm:$0xf]
        %s285 = scalar_lea.vmem %s1, 8
        %v286 = vld [vmem:[%s285] sm:$0xf]
        %v287 = vld [vmem:[%s285 + $0x4] sm:$0x3]
        %v296 = vunpack.c.l.b16 %v277
        %v297 = vunpack.c.l.b16 %v278
        %v298 = vunpack.c.l.b16 %v279
        %v299 = vunpack.c.l.b16 %v280
        %v300 = vunpack.c.l.b16 %v281
        %v301 = vunpack.c.l.b16 %v282
        %v302 = vunpack.c.l.b16 %v283
        %v303 = vunpack.c.l.b16 %v284
        %v304 = vpack.c.b16 %v297, %v296
        %v305 = vpack.c.b16 %v299, %v298
        %v306 = vpack.c.b16 %v301, %v300
        %v307 = vpack.c.b16 %v303, %v302
        %v310 = vunpack.c.l.b16 %v286
        %v311 = vunpack.c.l.b16 %v287
        %v312 = vpack.c.b16 %v311, %v310
        %vm313 = vcmask 97280
        %v315 = vsel %vm313, %v304, 0
        %v318 = vsel %vm313, %v305, 0
        %v321 = vsel %vm313, %v306, 0
        %v324 = vsel %vm313, %v307, 0
        %vm326 = vcmask 1045504
        %v328 = vsel %vm326, %v312, 0
        %330 = vmatprep.subr.bf16.mxu0 0
        %331 = vmatpush1.bf16.msra.mxu0 0
        %332 = vmatprep.subr.bf16.mxu0 0
        %333 = vmatpush1.bf16.msra.mxu0 0
        %334 = vmatprep.subr.bf16.mxu0 0
        %335 = vmatpush1.bf16.msra.mxu0 0
        %336 = vmatprep.subr.bf16.mxu0 0
        %337 = vmatpush1.bf16.msra.mxu0 0
        %338 = vmatprep.subr.bf16.mxu0 0
        %339 = vmatpush1.bf16.msra.mxu0 0
        %340 = vmatprep.subr.bf16.mxu0 0
        %341 = vmatpush1.bf16.msra.mxu0 0
        %342 = vmatprep.subr.bf16.mxu0 0
        %343 = vmatpush1.bf16.msra.mxu0 0
        %344 = vmatprep.subr.bf16.mxu0 0
        %345 = vmatpush1.bf16.msra.mxu0 %v328
        %346 = vmatprep.subr.bf16.mxu0 0
        %347 = vmatpush2.bf16.msra.mxu0 0
        %348 = vmatprep.subr.bf16.mxu0 0
        %349 = vmatpush2.bf16.msra.mxu0 0
        %350 = vmatprep.subr.bf16.mxu0 0
        %351 = vmatpush2.bf16.msra.mxu0 0
        %352 = vmatprep.subr.bf16.mxu0 0
        %353 = vmatpush2.bf16.msra.mxu0 0
        %354 = vmatprep.subr.bf16.mxu0 0
        %355 = vmatpush2.bf16.msra.mxu0 0
        %356 = vmatprep.subr.bf16.mxu0 0
        %357 = vmatpush2.bf16.msra.mxu0 0
        %358 = vmatprep.subr.bf16.mxu0 0
        %359 = vmatpush2.bf16.msra.mxu0 0
        %360 = vmatprep.subr.bf16.mxu0 0
        %361 = vmatpush2.bf16.msra.mxu0 0
        %362 = vmatprep.mubr.bf16.mxu0 0
        %363 = vmatmul.mubr.bf16.gmra.mxu0 %v315
        %v364 = vpop.f32.mrf.mxu0
        %v365 = vadd.f32 0.0, %v364
        %v366 = vpop.f32.mrf.mxu0
        %v367 = vpop.f32.mrf.mxu0
        %v368 = vadd.f32 0.0, %v367
        %v369 = vpop.f32.mrf.mxu0
        %370 = vmatprep.mubr.bf16.mxu0 0
        %371 = vmatmul.mubr.bf16.gmra.mxu0 %v318
        %v372 = vpop.f32.mrf.mxu0
        %v373 = vadd.f32 0.0, %v372
        %v374 = vpop.f32.mrf.mxu0
        %v375 = vpop.f32.mrf.mxu0
        %v376 = vadd.f32 0.0, %v375
        %v377 = vpop.f32.mrf.mxu0
        %378 = vmatprep.mubr.bf16.mxu0 0
        %379 = vmatmul.mubr.bf16.gmra.mxu0 %v321
        %v380 = vpop.f32.mrf.mxu0
        %v381 = vadd.f32 0.0, %v380
        %v382 = vpop.f32.mrf.mxu0
        %v383 = vpop.f32.mrf.mxu0
        %v384 = vadd.f32 0.0, %v383
        %v385 = vpop.f32.mrf.mxu0
        %386 = vmatprep.mubr.bf16.mxu0 0
        %387 = vmatmul.mubr.bf16.gmra.mxu0 %v324
        %v388 = vpop.f32.mrf.mxu0
        %v389 = vadd.f32 0.0, %v388
        %v390 = vpop.f32.mrf.mxu0
        %v391 = vpop.f32.mrf.mxu0
        %v392 = vadd.f32 0.0, %v391
        %v393 = vpop.f32.mrf.mxu0
        %394 = vdwg.mxu0
        %v403 = vunpack.c.l.b16 %v261
        %v404 = vunpack.c.l.b16 %v262
        %v405 = vunpack.c.l.b16 %v263
        %v406 = vunpack.c.l.b16 %v264
        %v407 = vunpack.c.l.b16 %v265
        %v408 = vunpack.c.l.b16 %v266
        %v409 = vunpack.c.l.b16 %v267
        %v410 = vunpack.c.l.b16 %v268
        %v411 = vpack.c.b16 %v404, %v403
        %v412 = vpack.c.b16 %v406, %v405
        %v413 = vpack.c.b16 %v408, %v407
        %v414 = vpack.c.b16 %v410, %v409
        %v417 = vunpack.c.l.b16 %v269
        %v418 = vunpack.c.l.b16 %v270
        %v419 = vpack.c.b16 %v418, %v417
        %v421 = vsel %vm313, %v411, 0
        %v424 = vsel %vm313, %v412, 0
        %v427 = vsel %vm313, %v413, 0
        %v430 = vsel %vm313, %v414, 0
        %v433 = vsel %vm326, %v419, 0
        %435 = vmatprep.subr.bf16.mxu0 0
        %436 = vmatpush1.bf16.msra.mxu0 0
        %437 = vmatprep.subr.bf16.mxu0 0
        %438 = vmatpush1.bf16.msra.mxu0 0
        %439 = vmatprep.subr.bf16.mxu0 0
        %440 = vmatpush1.bf16.msra.mxu0 0
        %441 = vmatprep.subr.bf16.mxu0 0
        %442 = vmatpush1.bf16.msra.mxu0 0
        %443 = vmatprep.subr.bf16.mxu0 0
        %444 = vmatpush1.bf16.msra.mxu0 0
        %445 = vmatprep.subr.bf16.mxu0 0
        %446 = vmatpush1.bf16.msra.mxu0 0
        %447 = vmatprep.subr.bf16.mxu0 0
        %448 = vmatpush1.bf16.msra.mxu0 0
        %449 = vmatprep.subr.bf16.mxu0 0
        %450 = vmatpush1.bf16.msra.mxu0 %v433
        %451 = vmatprep.subr.bf16.mxu0 0
        %452 = vmatpush2.bf16.msra.mxu0 0
        %453 = vmatprep.subr.bf16.mxu0 0
        %454 = vmatpush2.bf16.msra.mxu0 0
        %455 = vmatprep.subr.bf16.mxu0 0
        %456 = vmatpush2.bf16.msra.mxu0 0
        %457 = vmatprep.subr.bf16.mxu0 0
        %458 = vmatpush2.bf16.msra.mxu0 0
        %459 = vmatprep.subr.bf16.mxu0 0
        %460 = vmatpush2.bf16.msra.mxu0 0
        %461 = vmatprep.subr.bf16.mxu0 0
        %462 = vmatpush2.bf16.msra.mxu0 0
        %463 = vmatprep.subr.bf16.mxu0 0
        %464 = vmatpush2.bf16.msra.mxu0 0
        %465 = vmatprep.subr.bf16.mxu0 0
        %466 = vmatpush2.bf16.msra.mxu0 0
        %467 = vmatprep.mubr.bf16.mxu0 0
        %468 = vmatmul.mubr.bf16.gmra.mxu0 %v421
        %v469 = vpop.f32.mrf.mxu0
        %v470 = vadd.f32 %v365, %v469
        %v471 = vpop.f32.mrf.mxu0
        %v472 = vpop.f32.mrf.mxu0
        %v473 = vadd.f32 %v368, %v472
        %v474 = vpop.f32.mrf.mxu0
        %475 = vmatprep.mubr.bf16.mxu0 0
        %476 = vmatmul.mubr.bf16.gmra.mxu0 %v424
        %v477 = vpop.f32.mrf.mxu0
        %v478 = vadd.f32 %v373, %v477
        %v479 = vpop.f32.mrf.mxu0
        %v480 = vpop.f32.mrf.mxu0
        %v481 = vadd.f32 %v376, %v480
        %v482 = vpop.f32.mrf.mxu0
        %483 = vmatprep.mubr.bf16.mxu0 0
        %484 = vmatmul.mubr.bf16.gmra.mxu0 %v427
        %v485 = vpop.f32.mrf.mxu0
        %v486 = vadd.f32 %v381, %v485
        %v487 = vpop.f32.mrf.mxu0
        %v488 = vpop.f32.mrf.mxu0
        %v489 = vadd.f32 %v384, %v488
        %v490 = vpop.f32.mrf.mxu0
        %491 = vmatprep.mubr.bf16.mxu0 0
        %492 = vmatmul.mubr.bf16.gmra.mxu0 %v430
        %v493 = vpop.f32.mrf.mxu0
        %v494 = vadd.f32 %v389, %v493
        %v495 = vpop.f32.mrf.mxu0
        %v496 = vpop.f32.mrf.mxu0
        %v497 = vadd.f32 %v392, %v496
        %v498 = vpop.f32.mrf.mxu0
        %499 = vdwg.mxu0
        %s500 = sadd.s32 %s255, 2
        %s501 = smul.u32 %s500, 16
        %s502 = sshra.s32 %s501, 3
        %s503 = sand.u32 %s501, 7
        %s504 = smul.addr %s502, 4
        %s505 = scalar_lea.vmem %s242, %s504
        %v506 = vld [vmem:[%s505] sm:$0xf]
        %v507 = vld [vmem:[%s505 + $0x4] sm:$0xf]
        %v508 = vld [vmem:[%s505 + $0x8] sm:$0xf]
        %v509 = vld [vmem:[%s505 + $0xc] sm:$0xf]
        %v510 = vld [vmem:[%s505 + $0x10] sm:$0xf]
        %v511 = vld [vmem:[%s505 + $0x14] sm:$0xf]
        %v512 = vld [vmem:[%s505 + $0x18] sm:$0xf]
        %v513 = vld [vmem:[%s505 + $0x1c] sm:$0xf]
        %s514 = scalar_lea.vmem %s1, 16
        %v515 = vld [vmem:[%s514] sm:$0xf]
        %v516 = vld [vmem:[%s514 + $0x4] sm:$0x3]
        %v525 = vunpack.c.l.b16 %v506
        %v526 = vunpack.c.l.b16 %v507
        %v527 = vunpack.c.l.b16 %v508
        %v528 = vunpack.c.l.b16 %v509
        %v529 = vunpack.c.l.b16 %v510
        %v530 = vunpack.c.l.b16 %v511
        %v531 = vunpack.c.l.b16 %v512
        %v532 = vunpack.c.l.b16 %v513
        %v533 = vpack.c.b16 %v526, %v525
        %v534 = vpack.c.b16 %v528, %v527
        %v535 = vpack.c.b16 %v530, %v529
        %v536 = vpack.c.b16 %v532, %v531
        %v539 = vunpack.c.l.b16 %v515
        %v540 = vunpack.c.l.b16 %v516
        %v541 = vpack.c.b16 %v540, %v539
        %v543 = vsel %vm313, %v533, 0
        %v546 = vsel %vm313, %v534, 0
        %v549 = vsel %vm313, %v535, 0
        %v552 = vsel %vm313, %v536, 0
        %v555 = vsel %vm326, %v541, 0
        %557 = vmatprep.subr.bf16.mxu0 0
        %558 = vmatpush1.bf16.msra.mxu0 0
        %559 = vmatprep.subr.bf16.mxu0 0
        %560 = vmatpush1.bf16.msra.mxu0 0
        %561 = vmatprep.subr.bf16.mxu0 0
        %562 = vmatpush1.bf16.msra.mxu0 0
        %563 = vmatprep.subr.bf16.mxu0 0
        %564 = vmatpush1.bf16.msra.mxu0 0
        %565 = vmatprep.subr.bf16.mxu0 0
        %566 = vmatpush1.bf16.msra.mxu0 0
        %567 = vmatprep.subr.bf16.mxu0 0
        %568 = vmatpush1.bf16.msra.mxu0 0
        %569 = vmatprep.subr.bf16.mxu0 0
        %570 = vmatpush1.bf16.msra.mxu0 0
        %571 = vmatprep.subr.bf16.mxu0 0
        %572 = vmatpush1.bf16.msra.mxu0 %v555
        %573 = vmatprep.subr.bf16.mxu0 0
        %574 = vmatpush2.bf16.msra.mxu0 0
        %575 = vmatprep.subr.bf16.mxu0 0
        %576 = vmatpush2.bf16.msra.mxu0 0
        %577 = vmatprep.subr.bf16.mxu0 0
        %578 = vmatpush2.bf16.msra.mxu0 0
        %579 = vmatprep.subr.bf16.mxu0 0
        %580 = vmatpush2.bf16.msra.mxu0 0
        %581 = vmatprep.subr.bf16.mxu0 0
        %582 = vmatpush2.bf16.msra.mxu0 0
        %583 = vmatprep.subr.bf16.mxu0 0
        %584 = vmatpush2.bf16.msra.mxu0 0
        %585 = vmatprep.subr.bf16.mxu0 0
        %586 = vmatpush2.bf16.msra.mxu0 0
        %587 = vmatprep.subr.bf16.mxu0 0
        %588 = vmatpush2.bf16.msra.mxu0 0
        %589 = vmatprep.mubr.bf16.mxu0 0
        %590 = vmatmul.mubr.bf16.gmra.mxu0 %v543
        %v591 = vpop.f32.mrf.mxu0
        %v592 = vadd.f32 0.0, %v591
        %v593 = vpop.f32.mrf.mxu0
        %v594 = vpop.f32.mrf.mxu0
        %v595 = vadd.f32 0.0, %v594
        %v596 = vpop.f32.mrf.mxu0
        %597 = vmatprep.mubr.bf16.mxu0 0
        %598 = vmatmul.mubr.bf16.gmra.mxu0 %v546
        %v599 = vpop.f32.mrf.mxu0
        %v600 = vadd.f32 0.0, %v599
        %v601 = vpop.f32.mrf.mxu0
        %v602 = vpop.f32.mrf.mxu0
        %v603 = vadd.f32 0.0, %v602
        %v604 = vpop.f32.mrf.mxu0
        %605 = vmatprep.mubr.bf16.mxu0 0
        %606 = vmatmul.mubr.bf16.gmra.mxu0 %v549
        %v607 = vpop.f32.mrf.mxu0
        %v608 = vadd.f32 0.0, %v607
        %v609 = vpop.f32.mrf.mxu0
        %v610 = vpop.f32.mrf.mxu0
        %v611 = vadd.f32 0.0, %v610
        %v612 = vpop.f32.mrf.mxu0
        %613 = vmatprep.mubr.bf16.mxu0 0
        %614 = vmatmul.mubr.bf16.gmra.mxu0 %v552
        %v615 = vpop.f32.mrf.mxu0
        %v616 = vadd.f32 0.0, %v615
        %v617 = vpop.f32.mrf.mxu0
        %v618 = vpop.f32.mrf.mxu0
        %v619 = vadd.f32 0.0, %v618
        %v620 = vpop.f32.mrf.mxu0
        %621 = vdwg.mxu0
        %v622 = vadd.f32 %v470, %v592
        %v623 = vadd.f32 %v473, %v595
        %v624 = vadd.f32 %v478, %v600
        %v625 = vadd.f32 %v481, %v603
        %v626 = vadd.f32 %v486, %v608
        %v627 = vadd.f32 %v489, %v611
        %v628 = vadd.f32 %v494, %v616
        %v629 = vadd.f32 %v497, %v619
        %v630 = vpack.c.bf16 %v623, %v622
        %v631 = vpack.c.bf16 %v625, %v624
        %v632 = vpack.c.bf16 %v627, %v626
        %v633 = vpack.c.bf16 %v629, %v628
        %v638 = vunpack.c.l.b16 %v630
        %v639 = vunpack.c.h.b16 %v630
        %v640 = vunpack.c.l.b16 %v631
        %v641 = vunpack.c.h.b16 %v631
        %v642 = vunpack.c.l.b16 %v632
        %v643 = vunpack.c.h.b16 %v632
        %v644 = vunpack.c.l.b16 %v633
        %v645 = vunpack.c.h.b16 %v633
        %v646 = vpack.c.b16 %v638, %v638
        %v647 = vpack.c.b16 %v639, %v639
        %v648 = vpack.c.b16 %v640, %v640
        %v649 = vpack.c.b16 %v641, %v641
        %v650 = vpack.c.b16 %v642, %v642
        %v651 = vpack.c.b16 %v643, %v643
        %v652 = vpack.c.b16 %v644, %v644
        %v653 = vpack.c.b16 %v645, %v645
        %662 = vst [vmem:[%s223] sm:$0xf] %v646
        %663 = vst [vmem:[%s223 + $0x4] sm:$0xf] %v647
        %664 = vst [vmem:[%s223 + $0x8] sm:$0xf] %v648
        %665 = vst [vmem:[%s223 + $0xc] sm:$0xf] %v649
        %666 = vst [vmem:[%s223 + $0x10] sm:$0xf] %v650
        %667 = vst [vmem:[%s223 + $0x14] sm:$0xf] %v651
        %668 = vst [vmem:[%s223 + $0x18] sm:$0xf] %v652
        %669 = vst [vmem:[%s223 + $0x1c] sm:$0xf] %v653
        %v670 = vld [vmem:[%s230] sm:$0xff]
        %v671 = vadd.f32 %v622, %v623
        %v672 = vadd.f32 %v671, %v624
        %v673 = vadd.f32 %v672, %v625
        %v674 = vadd.f32 %v673, %v626
        %v675 = vadd.f32 %v674, %v627
        %v676 = vadd.f32 %v675, %v628
        %v677 = vadd.f32 %v676, %v629
        %v678 = vadd.f32 %v670, %v677
        %679 = vst [vmem:[%s230] sm:$0xff] %v678
        %v680 = vld [vmem:[%s237] sm:$0xff]
        %v681 = vmul.f32 %v622, %v622
        %v682 = vmul.f32 %v623, %v623
        %v683 = vmul.f32 %v624, %v624
        %v684 = vmul.f32 %v625, %v625
        %v685 = vmul.f32 %v626, %v626
        %v686 = vmul.f32 %v627, %v627
        %v687 = vmul.f32 %v628, %v628
        %v688 = vmul.f32 %v629, %v629
        %v689 = vadd.f32 %v681, %v682
        %v690 = vadd.f32 %v689, %v683
        %v691 = vadd.f32 %v690, %v684
        %v692 = vadd.f32 %v691, %v685
        %v693 = vadd.f32 %v692, %v686
        %v694 = vadd.f32 %v693, %v687
        %v695 = vadd.f32 %v694, %v688
        %v696 = vadd.f32 %v680, %v695
        %697 = vst [vmem:[%s237] sm:$0xff] %v696
        %s698 = sand.u32 %s102, 1
        %s699 = scalar_lea.sflag [#allocation3], %s698
        %s700 = sand.u32 %s102, 1
        %s701 = smul.addr %s700, 32
        %s702 = scalar_lea.vmem [#allocation2], %s701
        %s703 = sand.u32 %s22, 1
        %s704 = scalar_lea.sflag [#allocation5], %s703
        %s705 = sand.u32 %s130, 1
        %s706 = smul.addr %s705, 8
        %s707 = scalar_lea.vmem [#allocation4], %s706
        %s708 = sand.u32 %s22, 1
        %s709 = scalar_lea.sflag [#allocation5], %s708
        %s710 = sand.u32 %s158, 1
        %s711 = smul.addr %s710, 8
        %s712 = scalar_lea.vmem [#allocation6], %s711
        // Predicated region
        $region33: #{tpu_custom_call.1} parent=27 // pred_check
          %p713 = pneg %p112
        $region34: #{tpu_custom_call.1} parent=27 // pred_check_branch
          %715 = sbr.rel (%p713) target = $region36
        $region35: #{tpu_custom_call.1} parent=27 // pred_region
          %s716 = smul.u32 %s28, 2
          %s717 = sadd.s32 %s716, %s29
          %s718 = smul.u32 8, %s717
          %s720 = ssub.s32 512, 512
          %721 = vsyncadd %s699, %s720
          %s722 = smul.addr %s27, 32
          %s723 = sadd.s32 %s718, %s722
          %s724 = smul.addr %s723, 64
          %s725 = scalar_lea.hbm %s2, %s724
          %s726 = sshll.u32 %s702, 4
          %s727 = int_to_ptr.vmem [resolvable:$true] %s726
          %732 = dma.vmem_to_hbm [thread:$0]  %s727, 512, %s725, %s699, 64, 64, 4
        $region36: #{tpu_custom_call.1} parent=27 // pred_fallthru
          _
        // Predicated region
        $region37: #{tpu_custom_call.1} parent=27 // pred_check
          %p733 = pneg %p140
        $region38: #{tpu_custom_call.1} parent=27 // pred_check_branch
          %735 = sbr.rel (%p733) target = $region40
        $region39: #{tpu_custom_call.1} parent=27 // pred_region
          %s737 = ssub.s32 128, 128
          %738 = vsyncadd %s704, %s737
          %s739 = smul.addr %s27, 2
          %s740 = sadd.s32 %s28, %s739
          %s741 = smul.addr %s740, 128
          %s742 = scalar_lea.hbm %s3, %s741
          %s744 = sshll.u32 %s707, 4
          %s745 = int_to_ptr.vmem [resolvable:$true] %s744
          %747 = dma.vmem_to_hbm [thread:$0]  %s745, 128, %s742, %s704
        $region40: #{tpu_custom_call.1} parent=27 // pred_fallthru
          _
        // Predicated region
        $region41: #{tpu_custom_call.1} parent=27 // pred_check
          %p748 = pneg %p168
        $region42: #{tpu_custom_call.1} parent=27 // pred_check_branch
          %750 = sbr.rel (%p748) target = $region44
        $region43: #{tpu_custom_call.1} parent=27 // pred_region
          %s752 = ssub.s32 128, 128
          %753 = vsyncadd %s709, %s752
          %s754 = smul.addr %s27, 2
          %s755 = sadd.s32 %s28, %s754
          %s756 = smul.addr %s755, 128
          %s757 = scalar_lea.hbm %s4, %s756
          %s759 = sshll.u32 %s712, 4
          %s760 = int_to_ptr.vmem [resolvable:$true] %s759
          %762 = dma.vmem_to_hbm [thread:$0]  %s760, 128, %s757, %s709
        $region44: #{tpu_custom_call.1} parent=27 // pred_fallthru
          _
      $region28: #{tpu_custom_call.1} parent=5 // pred_fallthru
        _
      %p763 = scmp.le.s32.totalorder 2, %s17
      // Predicated region
      $region45: #{tpu_custom_call.1} parent=5 // pred_check
        %p764 = pneg %p763
      $region46: #{tpu_custom_call.1} parent=5 // pred_check_branch
        %766 = sbr.rel (%p764) target = $region48
      $region47: #{tpu_custom_call.1} parent=5 // pred_region
        %s767 = ssub.s32 %s17, 2
        // Predicated region
        $region49: #{tpu_custom_call.1} parent=47 // pred_check
          %p768 = pneg %p118
        $region50: #{tpu_custom_call.1} parent=47 // pred_check_branch
          %770 = sbr.rel (%p768) target = $region52
        $region51: #{tpu_custom_call.1} parent=47 // pred_region
          %s771 = sand.u32 %s103, 1
          %s772 = scalar_lea.sflag [#allocation3], %s771
          %s773 = sand.u32 %s103, 1
          %s774 = smul.addr %s773, 32
          %s775 = scalar_lea.vmem [#allocation2], %s774
          %776 = dma.done %s772, 512
        $region52: #{tpu_custom_call.1} parent=47 // pred_fallthru
          _
        // Predicated region
        $region53: #{tpu_custom_call.1} parent=47 // pred_check
          %p777 = pneg %p146
        $region54: #{tpu_custom_call.1} parent=47 // pred_check_branch
          %779 = sbr.rel (%p777) target = $region56
        $region55: #{tpu_custom_call.1} parent=47 // pred_region
          %s780 = sand.u32 %s23, 1
          %s781 = scalar_lea.sflag [#allocation5], %s780
          %s782 = sand.u32 %s131, 1
          %s783 = smul.addr %s782, 8
          %s784 = scalar_lea.vmem [#allocation4], %s783
          %785 = dma.done %s781, 128
        $region56: #{tpu_custom_call.1} parent=47 // pred_fallthru
          _
        // Predicated region
        $region57: #{tpu_custom_call.1} parent=47 // pred_check
          %p786 = pneg %p174
        $region58: #{tpu_custom_call.1} parent=47 // pred_check_branch
          %788 = sbr.rel (%p786) target = $region60
        $region59: #{tpu_custom_call.1} parent=47 // pred_region
          %s789 = sand.u32 %s23, 1
          %s790 = scalar_lea.sflag [#allocation5], %s789
          %s791 = sand.u32 %s159, 1
          %s792 = smul.addr %s791, 8
          %s793 = scalar_lea.vmem [#allocation6], %s792
          %794 = dma.done %s790, 128
        $region60: #{tpu_custom_call.1} parent=47 // pred_fallthru
          _
      $region48: #{tpu_custom_call.1} parent=5 // pred_fallthru
        _
    $region6: #{tpu_custom_call.1} parent=1 // loop_footer
      %s21 = sadd.s32 1, %s17
    $region7: #{tpu_custom_call.1} parent=1 // loop_footer_branch
      %16 = sbr.rel target = $region3
    $region8: #{tpu_custom_call.1} parent=1 // loop_exit
      _
    %795 = vsyncpa [#allocation3], 1
    %s796 = scalar_lea.sflag [#allocation3], 1
    %797 = vsyncpa %s796, 1
    %798 = vsyncpa [#allocation5], 1
    %s799 = scalar_lea.sflag [#allocation5], 1
    %800 = vsyncpa %s799, 1

</llo_original>
